<compile_context>
chip_gen: v7x
topology: tpu7x:2x2x1
jax: 0.10.0
libtpu: 0.0.40
codegen_flags: <defaults>
</compile_context>

<pallas_src>
import jax
import jax.numpy as jnp
import numpy as np
from jax.experimental import pallas as pl
from jax.experimental.pallas import tpu as pltpu

# ------------------------- small, module-consistent sizes -------------------------
BATCH = 2
C_IN = 4
HW_SIZE = 16                 # H = W
C_FEAT = 32                  # FeatureExtractor.n_out == KANLinear in_features
EMB_DIM = 32                 # emb_dim (scaled down from the 256 default for a small demo)
N_CLASS = 10
GRID_SIZE = 5                # efficient-KAN KANLinear defaults
SPLINE_ORDER = 3
N_COEF = GRID_SIZE + SPLINE_ORDER            # 8  basis functions per input feature
N_KNOTS = GRID_SIZE + 2 * SPLINE_ORDER + 1   # 12 knots per input feature
GRID_RANGE = (-1.0, 1.0)
N_CLASS_PAD = 128            # lane-dense classifier output width


# ============================== fused forward kernel ==============================
def ekan_fused_kernel(p_ref, cw_ref, sc_ref, kan_ref, o_ref):
    # p_ref:   (B*HW, Cin*9+1)   im2col patches, last column == 1.0 (conv bias column)
    # cw_ref:  (Cin*9+1, C_FEAT) conv weight as [K, N]; last row is the conv bias
    # sc_ref:  (2+4*ORDER, 11*IN) packed Cox-de-Boor constants (lane-concatenated,
    #                             chunk j of width IN holds the j-th basis' values):
    #            row 0: g[j]      row 1: g[j+1]          (order-0 indicators)
    #            rows 2+4l .. 5+4l for level k=l+1: g[j], g[j+k+1],
    #                             1/(g[j+k]-g[j]), 1/(g[j+k+1]-g[j+1]) (zero padded)
    # kan_ref: (IN + N_COEF*IN + 1, 128) fused KAN+classifier weights:
    #            rows [0, IN)            W1 = base_w^T @ clas_w^T   (padded to 128)
    #            rows [IN, IN+COEF*IN)   W2 = ssw_mat  @ clas_w^T   (padded to 128)
    #            last row                classifier bias            (padded to 128)
    # o_ref:   (B, 128)          logits, first N_CLASS lanes valid
    f32 = jnp.float32
    b = o_ref.shape[0]
    cf = cw_ref.shape[1]                       # conv channels == KAN in_features
    in_f = cf
    hw = p_ref.shape[0] // b
    ncoef_in = kan_ref.shape[0] - in_f - 1     # N_COEF * IN
    w0 = sc_ref.shape[1]                       # (N_KNOTS-1) * IN
    n_levels = (sc_ref.shape[0] - 2) // 4      # SPLINE_ORDER

    # ---- extractor: conv-as-matmul (bias via ones column) + ReLU + global avg pool ----
    y = jnp.dot(p_ref[...], cw_ref[...], preferred_element_type=f32)   # (B*HW, Cf)
    y = jnp.maximum(y, 0.0)
    # per-batch sublane reduction (rows are b-major, offsets are multiples of 8)
    feats = jnp.concatenate(
        [jnp.sum(y[i * hw:(i + 1) * hw, :], axis=0, keepdims=True) for i in range(b)],
        axis=0) * (1.0 / hw)                                           # (B, IN)

    # ---- KAN base branch fused with classifier: SiLU(x) @ W1 ----
    w1 = kan_ref[0:in_f, :]                                            # (IN, 128)
    out = jnp.dot(feats * jax.nn.sigmoid(feats), w1,
                  preferred_element_type=f32)                          # (B, 128)

    # ---- lane-vectorized Cox-de-Boor recursion at fixed width (B, 11*IN) ----
    x_rep = jnp.concatenate([feats] * (w0 // in_f), axis=-1)           # (B, 11*IN)
    bases = jnp.logical_and(x_rep >= sc_ref[0:1, :],
                            x_rep < sc_ref[1:2, :]).astype(f32)        # order-0 indicators
    zeros_chunk = jnp.zeros((b, in_f), f32)
    for lvl in range(n_levels):
        r0 = 2 + 4 * lvl
        glo = sc_ref[r0:r0 + 1, :]
        ghi = sc_ref[r0 + 1:r0 + 2, :]
        rc1 = sc_ref[r0 + 2:r0 + 3, :]
        rc2 = sc_ref[r0 + 3:r0 + 4, :]
        # bases[j+1] term: shift left by one IN-wide lane chunk (== pltpu.roll by -IN)
        hi = jnp.concatenate([bases[:, in_f:], zeros_chunk], axis=-1)
        bases = (x_rep - glo) * rc1 * bases + (ghi - x_rep) * rc2 * hi
    # valid chunks 0..N_COEF-1 are exactly the spline matmul input (coef-major)

    # ---- spline branch fused with classifier + classifier bias ----
    w2 = kan_ref[in_f:in_f + ncoef_in, :]                              # (COEF*IN, 128)
    cb = kan_ref[in_f + ncoef_in:in_f + ncoef_in + 1, :]               # (1, 128)
    out = out + jnp.dot(bases[:, :ncoef_in], w2,
                        preferred_element_type=f32) + cb
    o_ref[...] = out.astype(o_ref.dtype)


# =============================== wrapper / parameter prep ===============================
def _make_spline_consts(grid_t):
    """grid_t: (N_KNOTS, IN).  Returns (2 + 4*SPLINE_ORDER, (N_KNOTS-1)*IN) lane-
    concatenated knot / reciprocal constants, one row group per recursion level,
    zero padded past each level's valid width (so invalid lanes evaluate to 0)."""
    n_knots, in_f = grid_t.shape
    nb0 = n_knots - 1

    def row(a):                                 # (r, IN) -> (1, nb0*IN), chunk-major
        a = jnp.pad(a, ((0, nb0 - a.shape[0]), (0, 0)))
        return a.reshape(1, nb0 * in_f)

    def safe_recip(d):                          # guard repeated knots (0 -> 0)
        return jnp.where(d == 0, 0.0, 1.0 / d)

    rows = [row(grid_t[:nb0]), row(grid_t[1:nb0 + 1])]
    for k in range(1, SPLINE_ORDER + 1):
        nbk = nb0 - k
        rows.append(row(grid_t[0:nbk]))                                       # g[j]
        rows.append(row(grid_t[k + 1:k + 1 + nbk]))                           # g[j+k+1]
        rows.append(row(safe_recip(grid_t[k:k + nbk] - grid_t[0:nbk])))       # 1/(g[j+k]-g[j])
        rows.append(row(safe_recip(grid_t[k + 1:k + 1 + nbk] - grid_t[1:1 + nbk])))
    return jnp.concatenate(rows, axis=0)


@jax.jit
def ekan_forward(x, conv_w, conv_b, kan_grid, base_w, spline_w, spline_scaler,
                 clas_w, clas_b):
    f32 = jnp.float32
    B, Cin, H, W = x.shape
    Cf = conv_w.shape[0]
    hw = H * W
    kc = Cin * 9
    emb_dim = base_w.shape[0]
    in_f = base_w.shape[1]
    ncoef = spline_w.shape[2]
    ncls = clas_w.shape[0]

    # ---- im2col (fused/const-folded by jit); conv bias folded in as a ones column ----
    xp = jnp.pad(x, ((0, 0), (0, 0), (1, 1), (1, 1)))
    cols = [xp[:, :, kh:kh + H, kw:kw + W] for kh in range(3) for kw in range(3)]
    patches = jnp.stack(cols, axis=2).reshape(B, kc, hw)                 # (B, Cin*9, HW)
    patches = patches.transpose(0, 2, 1).reshape(B * hw, kc)             # (B*HW, Cin*9)
    patches = jnp.concatenate([patches, jnp.ones((B * hw, 1), f32)], axis=-1)

    conv_pack = jnp.concatenate([conv_w.reshape(Cf, kc).T,
                                 conv_b.reshape(1, Cf)], axis=0)         # (Cin*9+1, Cf)

    # ---- B-spline knot / reciprocal constants (lane-concatenated, per level) ----
    sconsts = _make_spline_consts(kan_grid.T)                            # (14, 11*IN)

    # ---- KAN weights with the classifier folded in (emb never materialized) ----
    ssw = spline_w * spline_scaler[:, :, None]                           # (EMB, IN, COEF)
    ssw_mat = jnp.transpose(ssw, (2, 1, 0)).reshape(ncoef * in_f, emb_dim)
    w1 = base_w.T @ clas_w.T                                             # (IN, NCLS)
    w2 = ssw_mat @ clas_w.T                                              # (COEF*IN, NCLS)
    kan_pack = jnp.concatenate([w1, w2, clas_b.reshape(1, ncls)], axis=0)
    kan_pack = jnp.pad(kan_pack, ((0, 0), (0, N_CLASS_PAD - ncls)))      # lane-dense N

    vmem = pl.BlockSpec(memory_space=pltpu.MemorySpace.VMEM)
    out = pl.pallas_call(
        ekan_fused_kernel,
        out_shape=jax.ShapeDtypeStruct((B, N_CLASS_PAD), f32),
        in_specs=[vmem, vmem, vmem, vmem],
        out_specs=vmem,
    )(patches, conv_pack, sconsts, kan_pack)
    return out[:, :ncls]


# ================================ pure-JAX reference ================================
def reference_forward(x, conv_w, conv_b, kan_grid, base_w, spline_w, spline_scaler,
                      clas_w, clas_b):
    B = x.shape[0]
    emb_dim = base_w.shape[0]
    y = jax.lax.conv_general_dilated(
        x, conv_w, window_strides=(1, 1), padding=((1, 1), (1, 1)),
        dimension_numbers=("NCHW", "OIHW", "NCHW"))
    y = jax.nn.relu(y + conv_b[None, :, None, None])
    feats = y.mean(axis=(2, 3))                                          # (B, IN)

    xe = feats[:, :, None]                                               # (B, IN, 1)
    gm = kan_grid[None, :, :]                                            # (1, IN, N_KNOTS)
    bases = ((xe >= gm[:, :, :-1]) & (xe < gm[:, :, 1:])).astype(jnp.float32)
    for kk in range(1, SPLINE_ORDER + 1):
        bases = ((xe - gm[:, :, : -(kk + 1)])
                 / (gm[:, :, kk:-1] - gm[:, :, : -(kk + 1)]) * bases[:, :, :-1]
                 + (gm[:, :, kk + 1:] - xe)
                 / (gm[:, :, kk + 1:] - gm[:, :, 1:-kk]) * bases[:, :, 1:])
    base_out = jax.nn.silu(feats) @ base_w.T
    ssw = spline_w * spline_scaler[:, :, None]                           # (EMB, IN, COEF)
    spline_out = bases.reshape(B, -1) @ ssw.reshape(emb_dim, -1).T
    emb = base_out + spline_out
    return emb @ clas_w.T + clas_b[None, :]


# ======================================= main =======================================
if __name__ == "__main__":
    key = jax.random.PRNGKey(0)
    keys = jax.random.split(key, 8)

    x = jax.random.normal(keys[0], (BATCH, C_IN, HW_SIZE, HW_SIZE), jnp.float32)

    # deterministic synthetic parameters (shapes follow the module's __init__)
    conv_w = 0.2 * jax.random.normal(keys[1], (C_FEAT, C_IN, 3, 3), jnp.float32)
    conv_b = 0.1 * jax.random.normal(keys[2], (C_FEAT,), jnp.float32)
    base_w = 0.3 * jax.random.normal(keys[3], (EMB_DIM, C_FEAT), jnp.float32)
    spline_w = 0.3 * jax.random.normal(keys[4], (EMB_DIM, C_FEAT, N_COEF), jnp.float32)
    spline_scaler = 1.0 + 0.1 * jax.random.normal(keys[5], (EMB_DIM, C_FEAT), jnp.float32)
    clas_w = 0.3 * jax.random.normal(keys[6], (N_CLASS, EMB_DIM), jnp.float32)
    clas_b = 0.1 * jax.random.normal(keys[7], (N_CLASS,), jnp.float32)

    # efficient-KAN grid buffer: (in_features, grid_size + 2*spline_order + 1)
    h = (GRID_RANGE[1] - GRID_RANGE[0]) / GRID_SIZE
    knots = (jnp.arange(-SPLINE_ORDER, GRID_SIZE + SPLINE_ORDER + 1,
                        dtype=jnp.float32) * h + GRID_RANGE[0])          # (N_KNOTS,)
    kan_grid = jnp.broadcast_to(knots[None, :], (C_FEAT, N_KNOTS))

    logits = ekan_forward(x, conv_w, conv_b, kan_grid, base_w, spline_w,
                          spline_scaler, clas_w, clas_b)
    logits = jax.block_until_ready(logits)

    ref = reference_forward(x, conv_w, conv_b, kan_grid, base_w, spline_w,
                            spline_scaler, clas_w, clas_b)

    assert logits.shape == (BATCH, N_CLASS)
    np.testing.assert_allclose(np.asarray(logits), np.asarray(ref),
                               rtol=1e-4, atol=1e-4)
    print("KERNEL_OK")
</pallas_src>

<mosaic_0001>
module attributes {stable_mosaic.version = 11 : i64} {
  func.func @ekan_fused_kernel(%arg0: memref<512x37xf32, #tpu.memory_space<vmem>>, %arg1: memref<37x32xf32, #tpu.memory_space<vmem>>, %arg2: memref<14x352xf32, #tpu.memory_space<vmem>>, %arg3: memref<289x128xf32, #tpu.memory_space<vmem>>, %arg4: memref<2x128xf32, #tpu.memory_space<vmem>>) attributes {dimension_semantics = [], scalar_prefetch = 0 : i64, scratch_operands = 0 : i64, tpu.core_type = #tpu.core_type<tc>} {
    %c0 = arith.constant 0 : index
    %c0_0 = arith.constant 0 : index
    %0 = vector.load %arg0[%c0, %c0_0] : memref<512x37xf32, #tpu.memory_space<vmem>>, vector<512x37xf32>
    %c0_1 = arith.constant 0 : index
    %c0_2 = arith.constant 0 : index
    %1 = vector.load %arg1[%c0_1, %c0_2] : memref<37x32xf32, #tpu.memory_space<vmem>>, vector<37x32xf32>
    %cst = arith.constant dense<0.000000e+00> : vector<512x32xf32>
    %2 = tpu.matmul %0, %1, %cst {dimension_numbers = #tpu.dot_dimension_numbers<[1], [0], [0], [1], [0, 0, 1, 1], [], []>} : vector<512x37xf32>, vector<37x32xf32>, vector<512x32xf32> -> vector<512x32xf32>
    %cst_3 = arith.constant 0.000000e+00 : f32
    %3 = vector.broadcast %cst_3 : f32 to vector<512x32xf32>
    %4 = arith.maximumf %2, %3 : vector<512x32xf32>
    %5 = vector.extract_strided_slice %4 {offsets = [0, 0], sizes = [256, 32], strides = [1, 1]} : vector<512x32xf32> to vector<256x32xf32>
    %cst_4 = arith.constant dense<0.000000e+00> : vector<32xf32>
    %6 = vector.multi_reduction <add>, %5, %cst_4 [0] : vector<256x32xf32> to vector<32xf32>
    %7 = vector.shape_cast %6 : vector<32xf32> to vector<1x32xf32>
    %8 = vector.extract_strided_slice %4 {offsets = [256, 0], sizes = [256, 32], strides = [1, 1]} : vector<512x32xf32> to vector<256x32xf32>
    %cst_5 = arith.constant dense<0.000000e+00> : vector<32xf32>
    %9 = vector.multi_reduction <add>, %8, %cst_5 [0] : vector<256x32xf32> to vector<32xf32>
    %10 = vector.shape_cast %9 : vector<32xf32> to vector<1x32xf32>
    %11 = tpu.concatenate %7, %10 in 0 : vector<1x32xf32>, vector<1x32xf32> -> vector<2x32xf32>
    %cst_6 = arith.constant 3.906250e-03 : f32
    %12 = vector.broadcast %cst_6 : f32 to vector<2x32xf32>
    %13 = arith.mulf %11, %12 : vector<2x32xf32>
    %c0_7 = arith.constant 0 : index
    %c0_8 = arith.constant 0 : index
    %14 = vector.load %arg3[%c0_7, %c0_8] : memref<289x128xf32, #tpu.memory_space<vmem>>, vector<32x128xf32>
    %15 = arith.negf %13 : vector<2x32xf32>
    %16 = math.exp %15 : vector<2x32xf32>
    %cst_9 = arith.constant 1.000000e+00 : f32
    %17 = vector.broadcast %cst_9 : f32 to vector<2x32xf32>
    %18 = arith.addf %17, %16 : vector<2x32xf32>
    %19 = arith.divf %17, %18 : vector<2x32xf32>
    %20 = arith.mulf %13, %19 : vector<2x32xf32>
    %cst_10 = arith.constant dense<0.000000e+00> : vector<2x128xf32>
    %21 = tpu.matmul %20, %14, %cst_10 {dimension_numbers = #tpu.dot_dimension_numbers<[1], [0], [0], [1], [0, 0, 1, 1], [], []>} : vector<2x32xf32>, vector<32x128xf32>, vector<2x128xf32> -> vector<2x128xf32>
    %22 = tpu.concatenate %13, %13, %13, %13, %13, %13, %13, %13, %13, %13, %13 in 1 : vector<2x32xf32>, vector<2x32xf32>, vector<2x32xf32>, vector<2x32xf32>, vector<2x32xf32>, vector<2x32xf32>, vector<2x32xf32>, vector<2x32xf32>, vector<2x32xf32>, vector<2x32xf32>, vector<2x32xf32> -> vector<2x352xf32>
    %c0_11 = arith.constant 0 : index
    %c0_12 = arith.constant 0 : index
    %23 = vector.load %arg2[%c0_11, %c0_12] : memref<14x352xf32, #tpu.memory_space<vmem>>, vector<1x352xf32>
    %24 = vector.broadcast %23 : vector<1x352xf32> to vector<2x352xf32>
    %25 = arith.cmpf oge, %22, %24 : vector<2x352xf32>
    %c1 = arith.constant 1 : index
    %c0_13 = arith.constant 0 : index
    %26 = vector.load %arg2[%c1, %c0_13] : memref<14x352xf32, #tpu.memory_space<vmem>>, vector<1x352xf32>
    %27 = vector.broadcast %26 : vector<1x352xf32> to vector<2x352xf32>
    %28 = arith.cmpf olt, %22, %27 : vector<2x352xf32>
    %29 = arith.andi %25, %28 : vector<2x352xi1>
    %30 = arith.extui %29 : vector<2x352xi1> to vector<2x352xi32>
    %31 = arith.sitofp %30 : vector<2x352xi32> to vector<2x352xf32>
    %cst_14 = arith.constant 0.000000e+00 : f32
    %32 = vector.broadcast %cst_14 : f32 to vector<2x32xf32>
    %c2 = arith.constant 2 : index
    %c0_15 = arith.constant 0 : index
    %33 = vector.load %arg2[%c2, %c0_15] : memref<14x352xf32, #tpu.memory_space<vmem>>, vector<1x352xf32>
    %c3 = arith.constant 3 : index
    %c0_16 = arith.constant 0 : index
    %34 = vector.load %arg2[%c3, %c0_16] : memref<14x352xf32, #tpu.memory_space<vmem>>, vector<1x352xf32>
    %c4 = arith.constant 4 : index
    %c0_17 = arith.constant 0 : index
    %35 = vector.load %arg2[%c4, %c0_17] : memref<14x352xf32, #tpu.memory_space<vmem>>, vector<1x352xf32>
    %c5 = arith.constant 5 : index
    %c0_18 = arith.constant 0 : index
    %36 = vector.load %arg2[%c5, %c0_18] : memref<14x352xf32, #tpu.memory_space<vmem>>, vector<1x352xf32>
    %37 = vector.extract_strided_slice %31 {offsets = [0, 32], sizes = [2, 320], strides = [1, 1]} : vector<2x352xf32> to vector<2x320xf32>
    %38 = tpu.concatenate %37, %32 in 1 : vector<2x320xf32>, vector<2x32xf32> -> vector<2x352xf32>
    %39 = vector.broadcast %33 : vector<1x352xf32> to vector<2x352xf32>
    %40 = arith.subf %22, %39 : vector<2x352xf32>
    %41 = vector.broadcast %35 : vector<1x352xf32> to vector<2x352xf32>
    %42 = arith.mulf %40, %41 : vector<2x352xf32>
    %43 = arith.mulf %42, %31 : vector<2x352xf32>
    %44 = vector.broadcast %34 : vector<1x352xf32> to vector<2x352xf32>
    %45 = arith.subf %44, %22 : vector<2x352xf32>
    %46 = vector.broadcast %36 : vector<1x352xf32> to vector<2x352xf32>
    %47 = arith.mulf %45, %46 : vector<2x352xf32>
    %48 = arith.mulf %47, %38 : vector<2x352xf32>
    %49 = arith.addf %43, %48 : vector<2x352xf32>
    %c6 = arith.constant 6 : index
    %c0_19 = arith.constant 0 : index
    %50 = vector.load %arg2[%c6, %c0_19] : memref<14x352xf32, #tpu.memory_space<vmem>>, vector<1x352xf32>
    %c7 = arith.constant 7 : index
    %c0_20 = arith.constant 0 : index
    %51 = vector.load %arg2[%c7, %c0_20] : memref<14x352xf32, #tpu.memory_space<vmem>>, vector<1x352xf32>
    %c8 = arith.constant 8 : index
    %c0_21 = arith.constant 0 : index
    %52 = vector.load %arg2[%c8, %c0_21] : memref<14x352xf32, #tpu.memory_space<vmem>>, vector<1x352xf32>
    %c9 = arith.constant 9 : index
    %c0_22 = arith.constant 0 : index
    %53 = vector.load %arg2[%c9, %c0_22] : memref<14x352xf32, #tpu.memory_space<vmem>>, vector<1x352xf32>
    %54 = vector.extract_strided_slice %49 {offsets = [0, 32], sizes = [2, 320], strides = [1, 1]} : vector<2x352xf32> to vector<2x320xf32>
    %55 = tpu.concatenate %54, %32 in 1 : vector<2x320xf32>, vector<2x32xf32> -> vector<2x352xf32>
    %56 = vector.broadcast %50 : vector<1x352xf32> to vector<2x352xf32>
    %57 = arith.subf %22, %56 : vector<2x352xf32>
    %58 = vector.broadcast %52 : vector<1x352xf32> to vector<2x352xf32>
    %59 = arith.mulf %57, %58 : vector<2x352xf32>
    %60 = arith.mulf %59, %49 : vector<2x352xf32>
    %61 = vector.broadcast %51 : vector<1x352xf32> to vector<2x352xf32>
    %62 = arith.subf %61, %22 : vector<2x352xf32>
    %63 = vector.broadcast %53 : vector<1x352xf32> to vector<2x352xf32>
    %64 = arith.mulf %62, %63 : vector<2x352xf32>
    %65 = arith.mulf %64, %55 : vector<2x352xf32>
    %66 = arith.addf %60, %65 : vector<2x352xf32>
    %c10 = arith.constant 10 : index
    %c0_23 = arith.constant 0 : index
    %67 = vector.load %arg2[%c10, %c0_23] : memref<14x352xf32, #tpu.memory_space<vmem>>, vector<1x352xf32>
    %c11 = arith.constant 11 : index
    %c0_24 = arith.constant 0 : index
    %68 = vector.load %arg2[%c11, %c0_24] : memref<14x352xf32, #tpu.memory_space<vmem>>, vector<1x352xf32>
    %c12 = arith.constant 12 : index
    %c0_25 = arith.constant 0 : index
    %69 = vector.load %arg2[%c12, %c0_25] : memref<14x352xf32, #tpu.memory_space<vmem>>, vector<1x352xf32>
    %c13 = arith.constant 13 : index
    %c0_26 = arith.constant 0 : index
    %70 = vector.load %arg2[%c13, %c0_26] : memref<14x352xf32, #tpu.memory_space<vmem>>, vector<1x352xf32>
    %71 = vector.extract_strided_slice %66 {offsets = [0, 32], sizes = [2, 320], strides = [1, 1]} : vector<2x352xf32> to vector<2x320xf32>
    %72 = tpu.concatenate %71, %32 in 1 : vector<2x320xf32>, vector<2x32xf32> -> vector<2x352xf32>
    %73 = vector.broadcast %67 : vector<1x352xf32> to vector<2x352xf32>
    %74 = arith.subf %22, %73 : vector<2x352xf32>
    %75 = vector.broadcast %69 : vector<1x352xf32> to vector<2x352xf32>
    %76 = arith.mulf %74, %75 : vector<2x352xf32>
    %77 = arith.mulf %76, %66 : vector<2x352xf32>
    %78 = vector.broadcast %68 : vector<1x352xf32> to vector<2x352xf32>
    %79 = arith.subf %78, %22 : vector<2x352xf32>
    %80 = vector.broadcast %70 : vector<1x352xf32> to vector<2x352xf32>
    %81 = arith.mulf %79, %80 : vector<2x352xf32>
    %82 = arith.mulf %81, %72 : vector<2x352xf32>
    %83 = arith.addf %77, %82 : vector<2x352xf32>
    %c32 = arith.constant 32 : index
    %c0_27 = arith.constant 0 : index
    %84 = vector.load %arg3[%c32, %c0_27] : memref<289x128xf32, #tpu.memory_space<vmem>>, vector<256x128xf32>
    %c288 = arith.constant 288 : index
    %c0_28 = arith.constant 0 : index
    %85 = vector.load %arg3[%c288, %c0_28] : memref<289x128xf32, #tpu.memory_space<vmem>>, vector<1x128xf32>
    %86 = vector.extract_strided_slice %83 {offsets = [0, 0], sizes = [2, 256], strides = [1, 1]} : vector<2x352xf32> to vector<2x256xf32>
    %cst_29 = arith.constant dense<0.000000e+00> : vector<2x128xf32>
    %87 = tpu.matmul %86, %84, %cst_29 {dimension_numbers = #tpu.dot_dimension_numbers<[1], [0], [0], [1], [0, 0, 1, 1], [], []>} : vector<2x256xf32>, vector<256x128xf32>, vector<2x128xf32> -> vector<2x128xf32>
    %88 = arith.addf %21, %87 : vector<2x128xf32>
    %89 = vector.broadcast %85 : vector<1x128xf32> to vector<2x128xf32>
    %90 = arith.addf %88, %89 : vector<2x128xf32>
    %c0_30 = arith.constant 0 : index
    %c0_31 = arith.constant 0 : index
    %91 = vector.load %arg4[%c0_30, %c0_31] : memref<2x128xf32, #tpu.memory_space<vmem>>, vector<2x128xf32>
    tpu.vector_store %arg4[%c0_30, %c0_31], %90 {strides = array<i32>} : memref<2x128xf32, #tpu.memory_space<vmem>>, vector<2x128xf32>,
    return
  }
}

</mosaic_0001>

<llo_original>
// kernel: ekan_forward.1
$region0: #{ekan_forward.1}
  #allocation0 [shape = 'u32[]', space=smem, size = 0x4, offset = 0x4, fixed_abs, tag = 'smem constant byte address 0x4 - core index']
  #allocation1 [shape = 'u32[144,128]{1,0:T(1,128)}', space=vmem, size = 0x12000, scoped, tag = 'internal scratch']
  %s0 = inlined_call_operand.vmem [shape: f32[512,37], index: 0, kind: input, shape index: {}]
  %s1 = inlined_call_operand.vmem [shape: f32[37,32], index: 1, kind: input, shape index: {}]
  %s2 = inlined_call_operand.vmem [shape: f32[14,352], index: 2, kind: input, shape index: {}]
  %s3 = inlined_call_operand.vmem [shape: f32[289,128], index: 3, kind: input, shape index: {}]
  %s4 = inlined_call_operand.hbm [shape: f32[2,128], index: 4, kind: output, shape index: {}]
  %s5 = sld [smem:[#allocation0]]
  $region26: #{ekan_forward.1} parent=0
    _
  %s7 = ssub.s32 1, %s5
  %s8 = scalar_select 0, %s7, %s5
  $region1: #{ekan_forward.1} parent=0
    #allocation2 [shape = 'u8[1024]{0}', space=vmem, size = 0x400, scoped, tag = 'output window, operand 0, single buffered']
    #allocation3 [shape = 's32[1]{0}', space=sflag, size = 0x4, scoped, tag = 'scoped memory for ekan_forward.1']
    %9 = vsyncpa [#allocation3], 0
    // Predicated region
    $region2: #{ekan_forward.1} parent=1 // pred_check
      _
    $region3: #{ekan_forward.1} parent=1 // pred_check_branch
      %11 = sbr.rel (0) target = $region5
    $region4: #{ekan_forward.1} parent=1 // pred_region
      _
    $region5: #{ekan_forward.1} parent=1 // pred_fallthru
      _
    // Predicated region
    $region6: #{ekan_forward.1} parent=1 // pred_check
      _
    $region7: #{ekan_forward.1} parent=1 // pred_check_branch
      %13 = sbr.rel (0) target = $region9
    $region8: #{ekan_forward.1} parent=1 // pred_region
      _
    $region9: #{ekan_forward.1} parent=1 // pred_fallthru
      _
    // Predicated region
    $region10: #{ekan_forward.1} parent=1 // pred_check
      _
    $region11: #{ekan_forward.1} parent=1 // pred_check_branch
      %15 = sbr.rel (0) target = $region13
    $region12: #{ekan_forward.1} parent=1 // pred_region
      _
    $region13: #{ekan_forward.1} parent=1 // pred_fallthru
      _
    // Predicated region
    $region14: #{ekan_forward.1} parent=1 // pred_check
      _
    $region15: #{ekan_forward.1} parent=1 // pred_check_branch
      %17 = sbr.rel (0) target = $region17
    $region16: #{ekan_forward.1} parent=1 // pred_region
      _
    $region17: #{ekan_forward.1} parent=1 // pred_fallthru
      _
    %v18 = vld [vmem:[%s0] sm:$0xff]
    %v19 = vld [vmem:[%s0 + $0x8] sm:$0xff]
    %v20 = vld [vmem:[%s0 + $0x10] sm:$0xff]
    %v21 = vld [vmem:[%s0 + $0x18] sm:$0xff]
    %v22 = vld [vmem:[%s0 + $0x20] sm:$0xff]
    %v23 = vld [vmem:[%s0 + $0x28] sm:$0xff]
    %v24 = vld [vmem:[%s0 + $0x30] sm:$0xff]
    %v25 = vld [vmem:[%s0 + $0x38] sm:$0xff]
    %v26 = vld [vmem:[%s0 + $0x40] sm:$0xff]
    %v27 = vld [vmem:[%s0 + $0x48] sm:$0xff]
    %v28 = vld [vmem:[%s0 + $0x50] sm:$0xff]
    %v29 = vld [vmem:[%s0 + $0x58] sm:$0xff]
    %v30 = vld [vmem:[%s0 + $0x60] sm:$0xff]
    %v31 = vld [vmem:[%s0 + $0x68] sm:$0xff]
    %v32 = vld [vmem:[%s0 + $0x70] sm:$0xff]
    %v33 = vld [vmem:[%s0 + $0x78] sm:$0xff]
    %v34 = vld [vmem:[%s0 + $0x80] sm:$0xff]
    %v35 = vld [vmem:[%s0 + $0x88] sm:$0xff]
    %v36 = vld [vmem:[%s0 + $0x90] sm:$0xff]
    %v37 = vld [vmem:[%s0 + $0x98] sm:$0xff]
    %v38 = vld [vmem:[%s0 + $0xa0] sm:$0xff]
    %v39 = vld [vmem:[%s0 + $0xa8] sm:$0xff]
    %v40 = vld [vmem:[%s0 + $0xb0] sm:$0xff]
    %v41 = vld [vmem:[%s0 + $0xb8] sm:$0xff]
    %v42 = vld [vmem:[%s0 + $0xc0] sm:$0xff]
    %v43 = vld [vmem:[%s0 + $0xc8] sm:$0xff]
    %v44 = vld [vmem:[%s0 + $0xd0] sm:$0xff]
    %v45 = vld [vmem:[%s0 + $0xd8] sm:$0xff]
    %v46 = vld [vmem:[%s0 + $0xe0] sm:$0xff]
    %v47 = vld [vmem:[%s0 + $0xe8] sm:$0xff]
    %v48 = vld [vmem:[%s0 + $0xf0] sm:$0xff]
    %v49 = vld [vmem:[%s0 + $0xf8] sm:$0xff]
    %v50 = vld [vmem:[%s0 + $0x100] sm:$0xff]
    %v51 = vld [vmem:[%s0 + $0x108] sm:$0xff]
    %v52 = vld [vmem:[%s0 + $0x110] sm:$0xff]
    %v53 = vld [vmem:[%s0 + $0x118] sm:$0xff]
    %v54 = vld [vmem:[%s0 + $0x120] sm:$0xff]
    %v55 = vld [vmem:[%s0 + $0x128] sm:$0xff]
    %v56 = vld [vmem:[%s0 + $0x130] sm:$0xff]
    %v57 = vld [vmem:[%s0 + $0x138] sm:$0xff]
    %v58 = vld [vmem:[%s0 + $0x140] sm:$0xff]
    %v59 = vld [vmem:[%s0 + $0x148] sm:$0xff]
    %v60 = vld [vmem:[%s0 + $0x150] sm:$0xff]
    %v61 = vld [vmem:[%s0 + $0x158] sm:$0xff]
    %v62 = vld [vmem:[%s0 + $0x160] sm:$0xff]
    %v63 = vld [vmem:[%s0 + $0x168] sm:$0xff]
    %v64 = vld [vmem:[%s0 + $0x170] sm:$0xff]
    %v65 = vld [vmem:[%s0 + $0x178] sm:$0xff]
    %v66 = vld [vmem:[%s0 + $0x180] sm:$0xff]
    %v67 = vld [vmem:[%s0 + $0x188] sm:$0xff]
    %v68 = vld [vmem:[%s0 + $0x190] sm:$0xff]
    %v69 = vld [vmem:[%s0 + $0x198] sm:$0xff]
    %v70 = vld [vmem:[%s0 + $0x1a0] sm:$0xff]
    %v71 = vld [vmem:[%s0 + $0x1a8] sm:$0xff]
    %v72 = vld [vmem:[%s0 + $0x1b0] sm:$0xff]
    %v73 = vld [vmem:[%s0 + $0x1b8] sm:$0xff]
    %v74 = vld [vmem:[%s0 + $0x1c0] sm:$0xff]
    %v75 = vld [vmem:[%s0 + $0x1c8] sm:$0xff]
    %v76 = vld [vmem:[%s0 + $0x1d0] sm:$0xff]
    %v77 = vld [vmem:[%s0 + $0x1d8] sm:$0xff]
    %v78 = vld [vmem:[%s0 + $0x1e0] sm:$0xff]
    %v79 = vld [vmem:[%s0 + $0x1e8] sm:$0xff]
    %v80 = vld [vmem:[%s0 + $0x1f0] sm:$0xff]
    %v81 = vld [vmem:[%s0 + $0x1f8] sm:$0xff]
    %v82 = vld [vmem:[%s1] sm:$0xff]
    %v83 = vld [vmem:[%s1 + $0x8] sm:$0xff]
    %v84 = vld [vmem:[%s1 + $0x10] sm:$0xff]
    %v85 = vld [vmem:[%s1 + $0x18] sm:$0xff]
    %v86 = vld [vmem:[%s1 + $0x20] sm:$0x1f]
    %vm87 = vcmask 302080
    %v89 = vsel %vm87, %v18, 0
    %v92 = vsel %vm87, %v19, 0
    %v95 = vsel %vm87, %v20, 0
    %v98 = vsel %vm87, %v21, 0
    %v101 = vsel %vm87, %v22, 0
    %v104 = vsel %vm87, %v23, 0
    %v107 = vsel %vm87, %v24, 0
    %v110 = vsel %vm87, %v25, 0
    %v113 = vsel %vm87, %v26, 0
    %v116 = vsel %vm87, %v27, 0
    %v119 = vsel %vm87, %v28, 0
    %v122 = vsel %vm87, %v29, 0
    %v125 = vsel %vm87, %v30, 0
    %v128 = vsel %vm87, %v31, 0
    %v131 = vsel %vm87, %v32, 0
    %v134 = vsel %vm87, %v33, 0
    %v137 = vsel %vm87, %v34, 0
    %v140 = vsel %vm87, %v35, 0
    %v143 = vsel %vm87, %v36, 0
    %v146 = vsel %vm87, %v37, 0
    %v149 = vsel %vm87, %v38, 0
    %v152 = vsel %vm87, %v39, 0
    %v155 = vsel %vm87, %v40, 0
    %v158 = vsel %vm87, %v41, 0
    %v161 = vsel %vm87, %v42, 0
    %v164 = vsel %vm87, %v43, 0
    %v167 = vsel %vm87, %v44, 0
    %v170 = vsel %vm87, %v45, 0
    %v173 = vsel %vm87, %v46, 0
    %v176 = vsel %vm87, %v47, 0
    %v179 = vsel %vm87, %v48, 0
    %v182 = vsel %vm87, %v49, 0
    %v185 = vsel %vm87, %v50, 0
    %v188 = vsel %vm87, %v51, 0
    %v191 = vsel %vm87, %v52, 0
    %v194 = vsel %vm87, %v53, 0
    %v197 = vsel %vm87, %v54, 0
    %v200 = vsel %vm87, %v55, 0
    %v203 = vsel %vm87, %v56, 0
    %v206 = vsel %vm87, %v57, 0
    %v209 = vsel %vm87, %v58, 0
    %v212 = vsel %vm87, %v59, 0
    %v215 = vsel %vm87, %v60, 0
    %v218 = vsel %vm87, %v61, 0
    %v221 = vsel %vm87, %v62, 0
    %v224 = vsel %vm87, %v63, 0
    %v227 = vsel %vm87, %v64, 0
    %v230 = vsel %vm87, %v65, 0
    %v233 = vsel %vm87, %v66, 0
    %v236 = vsel %vm87, %v67, 0
    %v239 = vsel %vm87, %v68, 0
    %v242 = vsel %vm87, %v69, 0
    %v245 = vsel %vm87, %v70, 0
    %v248 = vsel %vm87, %v71, 0
    %v251 = vsel %vm87, %v72, 0
    %v254 = vsel %vm87, %v73, 0
    %v257 = vsel %vm87, %v74, 0
    %v260 = vsel %vm87, %v75, 0
    %v263 = vsel %vm87, %v76, 0
    %v266 = vsel %vm87, %v77, 0
    %v269 = vsel %vm87, %v78, 0
    %v272 = vsel %vm87, %v79, 0
    %v275 = vsel %vm87, %v80, 0
    %v278 = vsel %vm87, %v81, 0
    %vm280 = vcmask 1044480
    %v282 = vsel %vm280, %v86, 0
    %284 = vmatprep.subr.mxu0 0.0
    %285 = vmatpush1.msra.mxu0 %v82
    %286 = vmatprep.subr.mxu0 0.0
    %287 = vmatpush1.msra.mxu0 %v83
    %288 = vmatprep.subr.mxu0 0.0
    %289 = vmatpush1.msra.mxu0 %v84
    %290 = vmatprep.subr.mxu0 0.0
    %291 = vmatpush1.msra.mxu0 %v85
    %292 = vmatprep.subr.mxu0 0.0
    %293 = vmatpush1.msra.mxu0 %v282
    %294 = vmatprep.subr.mxu0 0.0
    %295 = vmatpush1.msra.mxu0 0.0
    %296 = vmatprep.subr.mxu0 0.0
    %297 = vmatpush1.msra.mxu0 0.0
    %298 = vmatprep.subr.mxu0 0.0
    %299 = vmatpush1.msra.mxu0 0.0
    %300 = vmatprep.subr.mxu0 0.0
    %301 = vmatpush1.msra.mxu0 0.0
    %302 = vmatprep.subr.mxu0 0.0
    %303 = vmatpush1.msra.mxu0 0.0
    %304 = vmatprep.subr.mxu0 0.0
    %305 = vmatpush1.msra.mxu0 0.0
    %306 = vmatprep.subr.mxu0 0.0
    %307 = vmatpush1.msra.mxu0 0.0
    %308 = vmatprep.subr.mxu0 0.0
    %309 = vmatpush1.msra.mxu0 0.0
    %310 = vmatprep.subr.mxu0 0.0
    %311 = vmatpush1.msra.mxu0 0.0
    %312 = vmatprep.subr.mxu0 0.0
    %313 = vmatpush1.msra.mxu0 0.0
    %314 = vmatprep.subr.mxu0 0.0
    %315 = vmatpush1.msra.mxu0 0.0
    %316 = vmatprep.subr.mxu0 0.0
    %317 = vmatpush1.msra.mxu0 0.0
    %318 = vmatprep.subr.mxu0 0.0
    %319 = vmatpush1.msra.mxu0 0.0
    %320 = vmatprep.subr.mxu0 0.0
    %321 = vmatpush1.msra.mxu0 0.0
    %322 = vmatprep.subr.mxu0 0.0
    %323 = vmatpush1.msra.mxu0 0.0
    %324 = vmatprep.subr.mxu0 0.0
    %325 = vmatpush1.msra.mxu0 0.0
    %326 = vmatprep.subr.mxu0 0.0
    %327 = vmatpush1.msra.mxu0 0.0
    %328 = vmatprep.subr.mxu0 0.0
    %329 = vmatpush1.msra.mxu0 0.0
    %330 = vmatprep.subr.mxu0 0.0
    %331 = vmatpush1.msra.mxu0 0.0
    %332 = vmatprep.subr.mxu0 0.0
    %333 = vmatpush1.msra.mxu0 0.0
    %334 = vmatprep.subr.mxu0 0.0
    %335 = vmatpush1.msra.mxu0 0.0
    %336 = vmatprep.subr.mxu0 0.0
    %337 = vmatpush1.msra.mxu0 0.0
    %338 = vmatprep.subr.mxu0 0.0
    %339 = vmatpush1.msra.mxu0 0.0
    %340 = vmatprep.subr.mxu0 0.0
    %341 = vmatpush1.msra.mxu0 0.0
    %342 = vmatprep.subr.mxu0 0.0
    %343 = vmatpush1.msra.mxu0 0.0
    %344 = vmatprep.subr.mxu0 0.0
    %345 = vmatpush1.msra.mxu0 0.0
    %346 = vmatprep.subr.mxu0 0.0
    %347 = vmatpush1.msra.mxu0 0.0
    %348 = vmatprep.mubr.f32.mxu0 0.0
    %349 = vmatmul.mubr.f32.gmra.mrb[0].mxu0 %v89
    %v350 = vpop.f32.mrb[0].mxu0
    %v351 = vadd.f32 0.0, %v350
    %v352 = vpop.f32.mrb[0].mxu0
    %353 = vmatprep.mubr.f32.mxu0 0.0
    %354 = vmatmul.mubr.f32.gmra.mrb[0].mxu0 %v92
    %v355 = vpop.f32.mrb[0].mxu0
    %v356 = vadd.f32 0.0, %v355
    %v357 = vpop.f32.mrb[0].mxu0
    %358 = vmatprep.mubr.f32.mxu0 0.0
    %359 = vmatmul.mubr.f32.gmra.mrb[0].mxu0 %v95
    %v360 = vpop.f32.mrb[0].mxu0
    %v361 = vadd.f32 0.0, %v360
    %v362 = vpop.f32.mrb[0].mxu0
    %363 = vmatprep.mubr.f32.mxu0 0.0
    %364 = vmatmul.mubr.f32.gmra.mrb[0].mxu0 %v98
    %v365 = vpop.f32.mrb[0].mxu0
    %v366 = vadd.f32 0.0, %v365
    %v367 = vpop.f32.mrb[0].mxu0
    %368 = vmatprep.mubr.f32.mxu0 0.0
    %369 = vmatmul.mubr.f32.gmra.mrb[0].mxu0 %v101
    %v370 = vpop.f32.mrb[0].mxu0
    %v371 = vadd.f32 0.0, %v370
    %v372 = vpop.f32.mrb[0].mxu0
    %373 = vmatprep.mubr.f32.mxu0 0.0
    %374 = vmatmul.mubr.f32.gmra.mrb[0].mxu0 %v104
    %v375 = vpop.f32.mrb[0].mxu0
    %v376 = vadd.f32 0.0, %v375
    %v377 = vpop.f32.mrb[0].mxu0
    %378 = vmatprep.mubr.f32.mxu0 0.0
    %379 = vmatmul.mubr.f32.gmra.mrb[0].mxu0 %v107
    %v380 = vpop.f32.mrb[0].mxu0
    %v381 = vadd.f32 0.0, %v380
    %v382 = vpop.f32.mrb[0].mxu0
    %383 = vmatprep.mubr.f32.mxu0 0.0
    %384 = vmatmul.mubr.f32.gmra.mrb[0].mxu0 %v110
    %v385 = vpop.f32.mrb[0].mxu0
    %v386 = vadd.f32 0.0, %v385
    %v387 = vpop.f32.mrb[0].mxu0
    %388 = vmatprep.mubr.f32.mxu0 0.0
    %389 = vmatmul.mubr.f32.gmra.mrb[0].mxu0 %v113
    %v390 = vpop.f32.mrb[0].mxu0
    %v391 = vadd.f32 0.0, %v390
    %v392 = vpop.f32.mrb[0].mxu0
    %393 = vmatprep.mubr.f32.mxu0 0.0
    %394 = vmatmul.mubr.f32.gmra.mrb[0].mxu0 %v116
    %v395 = vpop.f32.mrb[0].mxu0
    %v396 = vadd.f32 0.0, %v395
    %v397 = vpop.f32.mrb[0].mxu0
    %398 = vmatprep.mubr.f32.mxu0 0.0
    %399 = vmatmul.mubr.f32.gmra.mrb[0].mxu0 %v119
    %v400 = vpop.f32.mrb[0].mxu0
    %v401 = vadd.f32 0.0, %v400
    %v402 = vpop.f32.mrb[0].mxu0
    %403 = vmatprep.mubr.f32.mxu0 0.0
    %404 = vmatmul.mubr.f32.gmra.mrb[0].mxu0 %v122
    %v405 = vpop.f32.mrb[0].mxu0
    %v406 = vadd.f32 0.0, %v405
    %v407 = vpop.f32.mrb[0].mxu0
    %408 = vmatprep.mubr.f32.mxu0 0.0
    %409 = vmatmul.mubr.f32.gmra.mrb[0].mxu0 %v125
    %v410 = vpop.f32.mrb[0].mxu0
    %v411 = vadd.f32 0.0, %v410
    %v412 = vpop.f32.mrb[0].mxu0
    %413 = vmatprep.mubr.f32.mxu0 0.0
    %414 = vmatmul.mubr.f32.gmra.mrb[0].mxu0 %v128
    %v415 = vpop.f32.mrb[0].mxu0
    %v416 = vadd.f32 0.0, %v415
    %v417 = vpop.f32.mrb[0].mxu0
    %418 = vmatprep.mubr.f32.mxu0 0.0
    %419 = vmatmul.mubr.f32.gmra.mrb[0].mxu0 %v131
    %v420 = vpop.f32.mrb[0].mxu0
    %v421 = vadd.f32 0.0, %v420
    %v422 = vpop.f32.mrb[0].mxu0
    %423 = vmatprep.mubr.f32.mxu0 0.0
    %424 = vmatmul.mubr.f32.gmra.mrb[0].mxu0 %v134
    %v425 = vpop.f32.mrb[0].mxu0
    %v426 = vadd.f32 0.0, %v425
    %v427 = vpop.f32.mrb[0].mxu0
    %428 = vmatprep.mubr.f32.mxu0 0.0
    %429 = vmatmul.mubr.f32.gmra.mrb[0].mxu0 %v137
    %v430 = vpop.f32.mrb[0].mxu0
    %v431 = vadd.f32 0.0, %v430
    %v432 = vpop.f32.mrb[0].mxu0
    %433 = vmatprep.mubr.f32.mxu0 0.0
    %434 = vmatmul.mubr.f32.gmra.mrb[0].mxu0 %v140
    %v435 = vpop.f32.mrb[0].mxu0
    %v436 = vadd.f32 0.0, %v435
    %v437 = vpop.f32.mrb[0].mxu0
    %438 = vmatprep.mubr.f32.mxu0 0.0
    %439 = vmatmul.mubr.f32.gmra.mrb[0].mxu0 %v143
    %v440 = vpop.f32.mrb[0].mxu0
    %v441 = vadd.f32 0.0, %v440
    %v442 = vpop.f32.mrb[0].mxu0
    %443 = vmatprep.mubr.f32.mxu0 0.0
    %444 = vmatmul.mubr.f32.gmra.mrb[0].mxu0 %v146
    %v445 = vpop.f32.mrb[0].mxu0
    %v446 = vadd.f32 0.0, %v445
    %v447 = vpop.f32.mrb[0].mxu0
    %448 = vmatprep.mubr.f32.mxu0 0.0
    %449 = vmatmul.mubr.f32.gmra.mrb[0].mxu0 %v149
    %v450 = vpop.f32.mrb[0].mxu0
    %v451 = vadd.f32 0.0, %v450
    %v452 = vpop.f32.mrb[0].mxu0
    %453 = vmatprep.mubr.f32.mxu0 0.0
    %454 = vmatmul.mubr.f32.gmra.mrb[0].mxu0 %v152
    %v455 = vpop.f32.mrb[0].mxu0
    %v456 = vadd.f32 0.0, %v455
    %v457 = vpop.f32.mrb[0].mxu0
    %458 = vmatprep.mubr.f32.mxu0 0.0
    %459 = vmatmul.mubr.f32.gmra.mrb[0].mxu0 %v155
    %v460 = vpop.f32.mrb[0].mxu0
    %v461 = vadd.f32 0.0, %v460
    %v462 = vpop.f32.mrb[0].mxu0
    %463 = vmatprep.mubr.f32.mxu0 0.0
    %464 = vmatmul.mubr.f32.gmra.mrb[0].mxu0 %v158
    %v465 = vpop.f32.mrb[0].mxu0
    %v466 = vadd.f32 0.0, %v465
    %v467 = vpop.f32.mrb[0].mxu0
    %468 = vmatprep.mubr.f32.mxu0 0.0
    %469 = vmatmul.mubr.f32.gmra.mrb[0].mxu0 %v161
    %v470 = vpop.f32.mrb[0].mxu0
    %v471 = vadd.f32 0.0, %v470
    %v472 = vpop.f32.mrb[0].mxu0
    %473 = vmatprep.mubr.f32.mxu0 0.0
    %474 = vmatmul.mubr.f32.gmra.mrb[0].mxu0 %v164
    %v475 = vpop.f32.mrb[0].mxu0
    %v476 = vadd.f32 0.0, %v475
    %v477 = vpop.f32.mrb[0].mxu0
    %478 = vmatprep.mubr.f32.mxu0 0.0
    %479 = vmatmul.mubr.f32.gmra.mrb[0].mxu0 %v167
    %v480 = vpop.f32.mrb[0].mxu0
    %v481 = vadd.f32 0.0, %v480
    %v482 = vpop.f32.mrb[0].mxu0
    %483 = vmatprep.mubr.f32.mxu0 0.0
    %484 = vmatmul.mubr.f32.gmra.mrb[0].mxu0 %v170
    %v485 = vpop.f32.mrb[0].mxu0
    %v486 = vadd.f32 0.0, %v485
    %v487 = vpop.f32.mrb[0].mxu0
    %488 = vmatprep.mubr.f32.mxu0 0.0
    %489 = vmatmul.mubr.f32.gmra.mrb[0].mxu0 %v173
    %v490 = vpop.f32.mrb[0].mxu0
    %v491 = vadd.f32 0.0, %v490
    %v492 = vpop.f32.mrb[0].mxu0
    %493 = vmatprep.mubr.f32.mxu0 0.0
    %494 = vmatmul.mubr.f32.gmra.mrb[0].mxu0 %v176
    %v495 = vpop.f32.mrb[0].mxu0
    %v496 = vadd.f32 0.0, %v495
    %v497 = vpop.f32.mrb[0].mxu0
    %498 = vmatprep.mubr.f32.mxu0 0.0
    %499 = vmatmul.mubr.f32.gmra.mrb[0].mxu0 %v179
    %v500 = vpop.f32.mrb[0].mxu0
    %v501 = vadd.f32 0.0, %v500
    %v502 = vpop.f32.mrb[0].mxu0
    %503 = vmatprep.mubr.f32.mxu0 0.0
    %504 = vmatmul.mubr.f32.gmra.mrb[0].mxu0 %v182
    %v505 = vpop.f32.mrb[0].mxu0
    %v506 = vadd.f32 0.0, %v505
    %v507 = vpop.f32.mrb[0].mxu0
    %508 = vmatprep.mubr.f32.mxu0 0.0
    %509 = vmatmul.mubr.f32.gmra.mrb[0].mxu0 %v185
    %v510 = vpop.f32.mrb[0].mxu0
    %v511 = vadd.f32 0.0, %v510
    %v512 = vpop.f32.mrb[0].mxu0
    %513 = vmatprep.mubr.f32.mxu0 0.0
    %514 = vmatmul.mubr.f32.gmra.mrb[0].mxu0 %v188
    %v515 = vpop.f32.mrb[0].mxu0
    %v516 = vadd.f32 0.0, %v515
    %v517 = vpop.f32.mrb[0].mxu0
    %518 = vmatprep.mubr.f32.mxu0 0.0
    %519 = vmatmul.mubr.f32.gmra.mrb[0].mxu0 %v191
    %v520 = vpop.f32.mrb[0].mxu0
    %v521 = vadd.f32 0.0, %v520
    %v522 = vpop.f32.mrb[0].mxu0
    %523 = vmatprep.mubr.f32.mxu0 0.0
    %524 = vmatmul.mubr.f32.gmra.mrb[0].mxu0 %v194
    %v525 = vpop.f32.mrb[0].mxu0
    %v526 = vadd.f32 0.0, %v525
    %v527 = vpop.f32.mrb[0].mxu0
    %528 = vmatprep.mubr.f32.mxu0 0.0
    %529 = vmatmul.mubr.f32.gmra.mrb[0].mxu0 %v197
    %v530 = vpop.f32.mrb[0].mxu0
    %v531 = vadd.f32 0.0, %v530
    %v532 = vpop.f32.mrb[0].mxu0
    %533 = vmatprep.mubr.f32.mxu0 0.0
    %534 = vmatmul.mubr.f32.gmra.mrb[0].mxu0 %v200
    %v535 = vpop.f32.mrb[0].mxu0
    %v536 = vadd.f32 0.0, %v535
    %v537 = vpop.f32.mrb[0].mxu0
    %538 = vmatprep.mubr.f32.mxu0 0.0
    %539 = vmatmul.mubr.f32.gmra.mrb[0].mxu0 %v203
    %v540 = vpop.f32.mrb[0].mxu0
    %v541 = vadd.f32 0.0, %v540
    %v542 = vpop.f32.mrb[0].mxu0
    %543 = vmatprep.mubr.f32.mxu0 0.0
    %544 = vmatmul.mubr.f32.gmra.mrb[0].mxu0 %v206
    %v545 = vpop.f32.mrb[0].mxu0
    %v546 = vadd.f32 0.0, %v545
    %v547 = vpop.f32.mrb[0].mxu0
    %548 = vmatprep.mubr.f32.mxu0 0.0
    %549 = vmatmul.mubr.f32.gmra.mrb[0].mxu0 %v209
    %v550 = vpop.f32.mrb[0].mxu0
    %v551 = vadd.f32 0.0, %v550
    %v552 = vpop.f32.mrb[0].mxu0
    %553 = vmatprep.mubr.f32.mxu0 0.0
    %554 = vmatmul.mubr.f32.gmra.mrb[0].mxu0 %v212
    %v555 = vpop.f32.mrb[0].mxu0
    %v556 = vadd.f32 0.0, %v555
    %v557 = vpop.f32.mrb[0].mxu0
    %558 = vmatprep.mubr.f32.mxu0 0.0
    %559 = vmatmul.mubr.f32.gmra.mrb[0].mxu0 %v215
    %v560 = vpop.f32.mrb[0].mxu0
    %v561 = vadd.f32 0.0, %v560
    %v562 = vpop.f32.mrb[0].mxu0
    %563 = vmatprep.mubr.f32.mxu0 0.0
    %564 = vmatmul.mubr.f32.gmra.mrb[0].mxu0 %v218
    %v565 = vpop.f32.mrb[0].mxu0
    %v566 = vadd.f32 0.0, %v565
    %v567 = vpop.f32.mrb[0].mxu0
    %568 = vmatprep.mubr.f32.mxu0 0.0
    %569 = vmatmul.mubr.f32.gmra.mrb[0].mxu0 %v221
    %v570 = vpop.f32.mrb[0].mxu0
    %v571 = vadd.f32 0.0, %v570
    %v572 = vpop.f32.mrb[0].mxu0
    %573 = vmatprep.mubr.f32.mxu0 0.0
    %574 = vmatmul.mubr.f32.gmra.mrb[0].mxu0 %v224
    %v575 = vpop.f32.mrb[0].mxu0
    %v576 = vadd.f32 0.0, %v575
    %v577 = vpop.f32.mrb[0].mxu0
    %578 = vmatprep.mubr.f32.mxu0 0.0
    %579 = vmatmul.mubr.f32.gmra.mrb[0].mxu0 %v227
    %v580 = vpop.f32.mrb[0].mxu0
    %v581 = vadd.f32 0.0, %v580
    %v582 = vpop.f32.mrb[0].mxu0
    %583 = vmatprep.mubr.f32.mxu0 0.0
    %584 = vmatmul.mubr.f32.gmra.mrb[0].mxu0 %v230
    %v585 = vpop.f32.mrb[0].mxu0
    %v586 = vadd.f32 0.0, %v585
    %v587 = vpop.f32.mrb[0].mxu0
    %588 = vmatprep.mubr.f32.mxu0 0.0
    %589 = vmatmul.mubr.f32.gmra.mrb[0].mxu0 %v233
    %v590 = vpop.f32.mrb[0].mxu0
    %v591 = vadd.f32 0.0, %v590
    %v592 = vpop.f32.mrb[0].mxu0
    %593 = vmatprep.mubr.f32.mxu0 0.0
    %594 = vmatmul.mubr.f32.gmra.mrb[0].mxu0 %v236
    %v595 = vpop.f32.mrb[0].mxu0
    %v596 = vadd.f32 0.0, %v595
    %v597 = vpop.f32.mrb[0].mxu0
    %598 = vmatprep.mubr.f32.mxu0 0.0
    %599 = vmatmul.mubr.f32.gmra.mrb[0].mxu0 %v239
    %v600 = vpop.f32.mrb[0].mxu0
    %v601 = vadd.f32 0.0, %v600
    %v602 = vpop.f32.mrb[0].mxu0
    %603 = vmatprep.mubr.f32.mxu0 0.0
    %604 = vmatmul.mubr.f32.gmra.mrb[0].mxu0 %v242
    %v605 = vpop.f32.mrb[0].mxu0
    %v606 = vadd.f32 0.0, %v605
    %v607 = vpop.f32.mrb[0].mxu0
    %608 = vmatprep.mubr.f32.mxu0 0.0
    %609 = vmatmul.mubr.f32.gmra.mrb[0].mxu0 %v245
    %v610 = vpop.f32.mrb[0].mxu0
    %v611 = vadd.f32 0.0, %v610
    %v612 = vpop.f32.mrb[0].mxu0
    %613 = vmatprep.mubr.f32.mxu0 0.0
    %614 = vmatmul.mubr.f32.gmra.mrb[0].mxu0 %v248
    %v615 = vpop.f32.mrb[0].mxu0
    %v616 = vadd.f32 0.0, %v615
    %v617 = vpop.f32.mrb[0].mxu0
    %618 = vmatprep.mubr.f32.mxu0 0.0
    %619 = vmatmul.mubr.f32.gmra.mrb[0].mxu0 %v251
    %v620 = vpop.f32.mrb[0].mxu0
    %v621 = vadd.f32 0.0, %v620
    %v622 = vpop.f32.mrb[0].mxu0
    %623 = vmatprep.mubr.f32.mxu0 0.0
    %624 = vmatmul.mubr.f32.gmra.mrb[0].mxu0 %v254
    %v625 = vpop.f32.mrb[0].mxu0
    %v626 = vadd.f32 0.0, %v625
    %v627 = vpop.f32.mrb[0].mxu0
    %628 = vmatprep.mubr.f32.mxu0 0.0
    %629 = vmatmul.mubr.f32.gmra.mrb[0].mxu0 %v257
    %v630 = vpop.f32.mrb[0].mxu0
    %v631 = vadd.f32 0.0, %v630
    %v632 = vpop.f32.mrb[0].mxu0
    %633 = vmatprep.mubr.f32.mxu0 0.0
    %634 = vmatmul.mubr.f32.gmra.mrb[0].mxu0 %v260
    %v635 = vpop.f32.mrb[0].mxu0
    %v636 = vadd.f32 0.0, %v635
    %v637 = vpop.f32.mrb[0].mxu0
    %638 = vmatprep.mubr.f32.mxu0 0.0
    %639 = vmatmul.mubr.f32.gmra.mrb[0].mxu0 %v263
    %v640 = vpop.f32.mrb[0].mxu0
    %v641 = vadd.f32 0.0, %v640
    %v642 = vpop.f32.mrb[0].mxu0
    %643 = vmatprep.mubr.f32.mxu0 0.0
    %644 = vmatmul.mubr.f32.gmra.mrb[0].mxu0 %v266
    %v645 = vpop.f32.mrb[0].mxu0
    %v646 = vadd.f32 0.0, %v645
    %v647 = vpop.f32.mrb[0].mxu0
    %648 = vmatprep.mubr.f32.mxu0 0.0
    %649 = vmatmul.mubr.f32.gmra.mrb[0].mxu0 %v269
    %v650 = vpop.f32.mrb[0].mxu0
    %v651 = vadd.f32 0.0, %v650
    %v652 = vpop.f32.mrb[0].mxu0
    %653 = vmatprep.mubr.f32.mxu0 0.0
    %654 = vmatmul.mubr.f32.gmra.mrb[0].mxu0 %v272
    %v655 = vpop.f32.mrb[0].mxu0
    %v656 = vadd.f32 0.0, %v655
    %v657 = vpop.f32.mrb[0].mxu0
    %658 = vmatprep.mubr.f32.mxu0 0.0
    %659 = vmatmul.mubr.f32.gmra.mrb[0].mxu0 %v275
    %v660 = vpop.f32.mrb[0].mxu0
    %v661 = vadd.f32 0.0, %v660
    %v662 = vpop.f32.mrb[0].mxu0
    %663 = vmatprep.mubr.f32.mxu0 0.0
    %664 = vmatmul.mubr.f32.gmra.mrb[0].mxu0 %v278
    %v665 = vpop.f32.mrb[0].mxu0
    %v666 = vadd.f32 0.0, %v665
    %v667 = vpop.f32.mrb[0].mxu0
    %668 = vdwg.mxu0
    %v669 = vmax.f32 %v351, 0.0
    %v670 = vmax.f32 %v356, 0.0
    %v671 = vmax.f32 %v361, 0.0
    %v672 = vmax.f32 %v366, 0.0
    %v673 = vmax.f32 %v371, 0.0
    %v674 = vmax.f32 %v376, 0.0
    %v675 = vmax.f32 %v381, 0.0
    %v676 = vmax.f32 %v386, 0.0
    %v677 = vmax.f32 %v391, 0.0
    %v678 = vmax.f32 %v396, 0.0
    %v679 = vmax.f32 %v401, 0.0
    %v680 = vmax.f32 %v406, 0.0
    %v681 = vmax.f32 %v411, 0.0
    %v682 = vmax.f32 %v416, 0.0
    %v683 = vmax.f32 %v421, 0.0
    %v684 = vmax.f32 %v426, 0.0
    %v685 = vmax.f32 %v431, 0.0
    %v686 = vmax.f32 %v436, 0.0
    %v687 = vmax.f32 %v441, 0.0
    %v688 = vmax.f32 %v446, 0.0
    %v689 = vmax.f32 %v451, 0.0
    %v690 = vmax.f32 %v456, 0.0
    %v691 = vmax.f32 %v461, 0.0
    %v692 = vmax.f32 %v466, 0.0
    %v693 = vmax.f32 %v471, 0.0
    %v694 = vmax.f32 %v476, 0.0
    %v695 = vmax.f32 %v481, 0.0
    %v696 = vmax.f32 %v486, 0.0
    %v697 = vmax.f32 %v491, 0.0
    %v698 = vmax.f32 %v496, 0.0
    %v699 = vmax.f32 %v501, 0.0
    %v700 = vmax.f32 %v506, 0.0
    %v701 = vmax.f32 %v511, 0.0
    %v702 = vmax.f32 %v516, 0.0
    %v703 = vmax.f32 %v521, 0.0
    %v704 = vmax.f32 %v526, 0.0
    %v705 = vmax.f32 %v531, 0.0
    %v706 = vmax.f32 %v536, 0.0
    %v707 = vmax.f32 %v541, 0.0
    %v708 = vmax.f32 %v546, 0.0
    %v709 = vmax.f32 %v551, 0.0
    %v710 = vmax.f32 %v556, 0.0
    %v711 = vmax.f32 %v561, 0.0
    %v712 = vmax.f32 %v566, 0.0
    %v713 = vmax.f32 %v571, 0.0
    %v714 = vmax.f32 %v576, 0.0
    %v715 = vmax.f32 %v581, 0.0
    %v716 = vmax.f32 %v586, 0.0
    %v717 = vmax.f32 %v591, 0.0
    %v718 = vmax.f32 %v596, 0.0
    %v719 = vmax.f32 %v601, 0.0
    %v720 = vmax.f32 %v606, 0.0
    %v721 = vmax.f32 %v611, 0.0
    %v722 = vmax.f32 %v616, 0.0
    %v723 = vmax.f32 %v621, 0.0
    %v724 = vmax.f32 %v626, 0.0
    %v725 = vmax.f32 %v631, 0.0
    %v726 = vmax.f32 %v636, 0.0
    %v727 = vmax.f32 %v641, 0.0
    %v728 = vmax.f32 %v646, 0.0
    %v729 = vmax.f32 %v651, 0.0
    %v730 = vmax.f32 %v656, 0.0
    %v731 = vmax.f32 %v661, 0.0
    %v732 = vmax.f32 %v666, 0.0
    %vm733 = vcmask 261120
    %v734 = vsel %vm733, %v669, 0.0
    %v735 = vsel %vm733, %v670, 0.0
    %v736 = vadd.f32 %v734, %v735
    %v737 = vsel %vm733, %v671, 0.0
    %v738 = vadd.f32 %v736, %v737
    %v739 = vsel %vm733, %v672, 0.0
    %v740 = vadd.f32 %v738, %v739
    %v741 = vsel %vm733, %v673, 0.0
    %v742 = vadd.f32 %v740, %v741
    %v743 = vsel %vm733, %v674, 0.0
    %v744 = vadd.f32 %v742, %v743
    %v745 = vsel %vm733, %v675, 0.0
    %v746 = vadd.f32 %v744, %v745
    %v747 = vsel %vm733, %v676, 0.0
    %v748 = vadd.f32 %v746, %v747
    %v749 = vsel %vm733, %v677, 0.0
    %v750 = vadd.f32 %v748, %v749
    %v751 = vsel %vm733, %v678, 0.0
    %v752 = vadd.f32 %v750, %v751
    %v753 = vsel %vm733, %v679, 0.0
    %v754 = vadd.f32 %v752, %v753
    %v755 = vsel %vm733, %v680, 0.0
    %v756 = vadd.f32 %v754, %v755
    %v757 = vsel %vm733, %v681, 0.0
    %v758 = vadd.f32 %v756, %v757
    %v759 = vsel %vm733, %v682, 0.0
    %v760 = vadd.f32 %v758, %v759
    %v761 = vsel %vm733, %v683, 0.0
    %v762 = vadd.f32 %v760, %v761
    %v763 = vsel %vm733, %v684, 0.0
    %v764 = vadd.f32 %v762, %v763
    %v765 = vsel %vm733, %v685, 0.0
    %v766 = vadd.f32 %v764, %v765
    %v767 = vsel %vm733, %v686, 0.0
    %v768 = vadd.f32 %v766, %v767
    %v769 = vsel %vm733, %v687, 0.0
    %v770 = vadd.f32 %v768, %v769
    %v771 = vsel %vm733, %v688, 0.0
    %v772 = vadd.f32 %v770, %v771
    %v773 = vsel %vm733, %v689, 0.0
    %v774 = vadd.f32 %v772, %v773
    %v775 = vsel %vm733, %v690, 0.0
    %v776 = vadd.f32 %v774, %v775
    %v777 = vsel %vm733, %v691, 0.0
    %v778 = vadd.f32 %v776, %v777
    %v779 = vsel %vm733, %v692, 0.0
    %v780 = vadd.f32 %v778, %v779
    %v781 = vsel %vm733, %v693, 0.0
    %v782 = vadd.f32 %v780, %v781
    %v783 = vsel %vm733, %v694, 0.0
    %v784 = vadd.f32 %v782, %v783
    %v785 = vsel %vm733, %v695, 0.0
    %v786 = vadd.f32 %v784, %v785
    %v787 = vsel %vm733, %v696, 0.0
    %v788 = vadd.f32 %v786, %v787
    %v789 = vsel %vm733, %v697, 0.0
    %v790 = vadd.f32 %v788, %v789
    %v791 = vsel %vm733, %v698, 0.0
    %v792 = vadd.f32 %v790, %v791
    %v793 = vsel %vm733, %v699, 0.0
    %v794 = vadd.f32 %v792, %v793
    %v795 = vsel %vm733, %v700, 0.0
    %v796 = vadd.f32 %v794, %v795
    %v797 = vrot.slane %v796, 4
    %v798 = vadd.f32 %v796, %v797
    %v799 = vrot.slane %v798, 2
    %v800 = vadd.f32 %v798, %v799
    %v801 = vrot.slane %v800, 1
    %v802 = vadd.f32 %v800, %v801
    %v803 = vsel %vm733, %v701, 0.0
    %v804 = vsel %vm733, %v702, 0.0
    %v805 = vadd.f32 %v803, %v804
    %v806 = vsel %vm733, %v703, 0.0
    %v807 = vadd.f32 %v805, %v806
    %v808 = vsel %vm733, %v704, 0.0
    %v809 = vadd.f32 %v807, %v808
    %v810 = vsel %vm733, %v705, 0.0
    %v811 = vadd.f32 %v809, %v810
    %v812 = vsel %vm733, %v706, 0.0
    %v813 = vadd.f32 %v811, %v812
    %v814 = vsel %vm733, %v707, 0.0
    %v815 = vadd.f32 %v813, %v814
    %v816 = vsel %vm733, %v708, 0.0
    %v817 = vadd.f32 %v815, %v816
    %v818 = vsel %vm733, %v709, 0.0
    %v819 = vadd.f32 %v817, %v818
    %v820 = vsel %vm733, %v710, 0.0
    %v821 = vadd.f32 %v819, %v820
    %v822 = vsel %vm733, %v711, 0.0
    %v823 = vadd.f32 %v821, %v822
    %v824 = vsel %vm733, %v712, 0.0
    %v825 = vadd.f32 %v823, %v824
    %v826 = vsel %vm733, %v713, 0.0
    %v827 = vadd.f32 %v825, %v826
    %v828 = vsel %vm733, %v714, 0.0
    %v829 = vadd.f32 %v827, %v828
    %v830 = vsel %vm733, %v715, 0.0
    %v831 = vadd.f32 %v829, %v830
    %v832 = vsel %vm733, %v716, 0.0
    %v833 = vadd.f32 %v831, %v832
    %v834 = vsel %vm733, %v717, 0.0
    %v835 = vadd.f32 %v833, %v834
    %v836 = vsel %vm733, %v718, 0.0
    %v837 = vadd.f32 %v835, %v836
    %v838 = vsel %vm733, %v719, 0.0
    %v839 = vadd.f32 %v837, %v838
    %v840 = vsel %vm733, %v720, 0.0
    %v841 = vadd.f32 %v839, %v840
    %v842 = vsel %vm733, %v721, 0.0
    %v843 = vadd.f32 %v841, %v842
    %v844 = vsel %vm733, %v722, 0.0
    %v845 = vadd.f32 %v843, %v844
    %v846 = vsel %vm733, %v723, 0.0
    %v847 = vadd.f32 %v845, %v846
    %v848 = vsel %vm733, %v724, 0.0
    %v849 = vadd.f32 %v847, %v848
    %v850 = vsel %vm733, %v725, 0.0
    %v851 = vadd.f32 %v849, %v850
    %v852 = vsel %vm733, %v726, 0.0
    %v853 = vadd.f32 %v851, %v852
    %v854 = vsel %vm733, %v727, 0.0
    %v855 = vadd.f32 %v853, %v854
    %v856 = vsel %vm733, %v728, 0.0
    %v857 = vadd.f32 %v855, %v856
    %v858 = vsel %vm733, %v729, 0.0
    %v859 = vadd.f32 %v857, %v858
    %v860 = vsel %vm733, %v730, 0.0
    %v861 = vadd.f32 %v859, %v860
    %v862 = vsel %vm733, %v731, 0.0
    %v863 = vadd.f32 %v861, %v862
    %v864 = vsel %vm733, %v732, 0.0
    %v865 = vadd.f32 %v863, %v864
    %v866 = vrot.slane %v865, 4
    %v867 = vadd.f32 %v865, %v866
    %v868 = vrot.slane %v867, 2
    %v869 = vadd.f32 %v867, %v868
    %v870 = vrot.slane %v869, 1
    %v871 = vadd.f32 %v869, %v870
    %vm872 = vcmask 1040384
    %v873 = vsel %vm872, %v802, %v871
    %v874 = vmul.f32 %v873, 0.00390625
    %v875 = vld [vmem:[%s3] sm:$0xff]
    %v876 = vld [vmem:[%s3 + $0x8] sm:$0xff]
    %v877 = vld [vmem:[%s3 + $0x10] sm:$0xff]
    %v878 = vld [vmem:[%s3 + $0x18] sm:$0xff]
    %v879 = vxor.u32 %v874, 2147483648
    %v880 = vmul.f32 %v879, 1.442695
    %v881 = vpow.pop %v880
    %v882 = vadd.f32 %v881, 1.0
    %v883 = vrcp.pop %v882
    %v884 = vmul.f32 1.0, %v883
    %v885 = vmul.f32 %v874, %v884
    %887 = vrot.lane.b32.xlu0 %v874, 32
    %v888 = vpop.permute.xlu0 %887
    %890 = vrot.lane.b32.xlu0 %v874, 64
    %v891 = vpop.permute.xlu0 %890
    %893 = vrot.lane.b32.xlu0 %v874, 96
    %v894 = vpop.permute.xlu0 %893
    %v896 = vsel %vm733, %v874, %v888
    %vm897 = vcmask 523264
    %v898 = vsel %vm897, %v896, %v891
    %vm899 = vcmask 785408
    %v900 = vsel %vm899, %v898, %v894
    %v901 = vld [vmem:[%s2] ss:$8 sm:$0x7]
    %v903 = vlaneseq
    %v904 = vshrl.u32 %v903, 7
    %v905 = vsub.s32 0, %v904
    %v906 = vrot.slane %v901, %v905
    %v907 = vlaneseq
    %v908 = vshrl.u32 %v907, 7
    %v909 = vsub.s32 1, %v908
    %v910 = vrot.slane %v901, %v909
    %v911 = vlaneseq
    %v912 = vshrl.u32 %v911, 7
    %v913 = vsub.s32 2, %v912
    %v914 = vrot.slane %v901, %v913
    %vm918 = vcmp.ge.f32.partialorder %v900, %v906
    %vm919 = vcmp.ge.f32.partialorder %v900, %v910
    %vm920 = vcmp.ge.f32.partialorder %v898, %v914
    %s921 = scalar_lea.vmem %s2, 1
    %v922 = vld [vmem:[%s921] ss:$8 sm:$0x7]
    %v924 = vlaneseq
    %v925 = vshrl.u32 %v924, 7
    %v926 = vsub.s32 0, %v925
    %v927 = vrot.slane %v922, %v926
    %v928 = vlaneseq
    %v929 = vshrl.u32 %v928, 7
    %v930 = vsub.s32 1, %v929
    %v931 = vrot.slane %v922, %v930
    %v932 = vlaneseq
    %v933 = vshrl.u32 %v932, 7
    %v934 = vsub.s32 2, %v933
    %v935 = vrot.slane %v922, %v934
    %vm939 = vcmp.lt.f32.partialorder %v900, %v927
    %vm940 = vcmp.lt.f32.partialorder %v900, %v931
    %vm941 = vcmp.lt.f32.partialorder %v898, %v935
    %vm942 = vmand %vm918, %vm939
    %vm943 = vmand %vm919, %vm940
    %vm944 = vmand %vm920, %vm941
    %v945 = vsel %vm942, 1, 0
    %v946 = vsel %vm943, 1, 0
    %v947 = vsel %vm944, 1, 0
    %v948 = vcvt.s32.f32 %v945
    %v949 = vcvt.s32.f32 %v946
    %v950 = vcvt.s32.f32 %v947
    %s951 = scalar_lea.vmem %s2, 2
    %v952 = vld [vmem:[%s951] ss:$8 sm:$0x7]
    %s953 = scalar_lea.vmem %s2, 3
    %v954 = vld [vmem:[%s953] ss:$8 sm:$0x7]
    %s955 = scalar_lea.vmem %s2, 4
    %v956 = vld [vmem:[%s955] ss:$8 sm:$0x7]
    %s957 = scalar_lea.vmem %s2, 5
    %v958 = vld [vmem:[%s957] ss:$8 sm:$0x7]
    %962 = vrot.lane.b32.xlu0 %v948, 96
    %v963 = vpop.permute.xlu0 %962
    %964 = vrot.lane.b32.xlu0 %v949, 96
    %v965 = vpop.permute.xlu0 %964
    %966 = vrot.lane.b32.xlu0 %v950, 96
    %v967 = vpop.permute.xlu0 %966
    %v968 = vsel %vm899, %v963, %v965
    %v969 = vsel %vm899, %v965, %v967
    %v973 = vsel %vm897, %v967, 0.0
    %v975 = vlaneseq
    %v976 = vshrl.u32 %v975, 7
    %v977 = vsub.s32 0, %v976
    %v978 = vrot.slane %v952, %v977
    %v979 = vlaneseq
    %v980 = vshrl.u32 %v979, 7
    %v981 = vsub.s32 1, %v980
    %v982 = vrot.slane %v952, %v981
    %v983 = vlaneseq
    %v984 = vshrl.u32 %v983, 7
    %v985 = vsub.s32 2, %v984
    %v986 = vrot.slane %v952, %v985
    %v990 = vsub.f32 %v900, %v978
    %v991 = vsub.f32 %v900, %v982
    %v992 = vsub.f32 %v898, %v986
    %v994 = vlaneseq
    %v995 = vshrl.u32 %v994, 7
    %v996 = vsub.s32 0, %v995
    %v997 = vrot.slane %v956, %v996
    %v998 = vlaneseq
    %v999 = vshrl.u32 %v998, 7
    %v1000 = vsub.s32 1, %v999
    %v1001 = vrot.slane %v956, %v1000
    %v1002 = vlaneseq
    %v1003 = vshrl.u32 %v1002, 7
    %v1004 = vsub.s32 2, %v1003
    %v1005 = vrot.slane %v956, %v1004
    %v1009 = vmul.f32 %v990, %v997
    %v1010 = vmul.f32 %v991, %v1001
    %v1011 = vmul.f32 %v992, %v1005
    %v1012 = vmul.f32 %v1009, %v948
    %v1013 = vmul.f32 %v1010, %v949
    %v1014 = vmul.f32 %v1011, %v950
    %v1016 = vlaneseq
    %v1017 = vshrl.u32 %v1016, 7
    %v1018 = vsub.s32 0, %v1017
    %v1019 = vrot.slane %v954, %v1018
    %v1020 = vlaneseq
    %v1021 = vshrl.u32 %v1020, 7
    %v1022 = vsub.s32 1, %v1021
    %v1023 = vrot.slane %v954, %v1022
    %v1024 = vlaneseq
    %v1025 = vshrl.u32 %v1024, 7
    %v1026 = vsub.s32 2, %v1025
    %v1027 = vrot.slane %v954, %v1026
    %v1031 = vsub.f32 %v1019, %v900
    %v1032 = vsub.f32 %v1023, %v900
    %v1033 = vsub.f32 %v1027, %v898
    %v1035 = vlaneseq
    %v1036 = vshrl.u32 %v1035, 7
    %v1037 = vsub.s32 0, %v1036
    %v1038 = vrot.slane %v958, %v1037
    %v1039 = vlaneseq
    %v1040 = vshrl.u32 %v1039, 7
    %v1041 = vsub.s32 1, %v1040
    %v1042 = vrot.slane %v958, %v1041
    %v1043 = vlaneseq
    %v1044 = vshrl.u32 %v1043, 7
    %v1045 = vsub.s32 2, %v1044
    %v1046 = vrot.slane %v958, %v1045
    %v1050 = vmul.f32 %v1031, %v1038
    %v1051 = vmul.f32 %v1032, %v1042
    %v1052 = vmul.f32 %v1033, %v1046
    %v1053 = vmul.f32 %v1050, %v968
    %v1054 = vmul.f32 %v1051, %v969
    %v1055 = vmul.f32 %v1052, %v973
    %v1056 = vadd.f32 %v1012, %v1053
    %v1057 = vadd.f32 %v1013, %v1054
    %v1058 = vadd.f32 %v1014, %v1055
    %s1059 = scalar_lea.vmem %s2, 6
    %v1060 = vld [vmem:[%s1059] ss:$8 sm:$0x7]
    %s1061 = scalar_lea.vmem %s2, 7
    %v1062 = vld [vmem:[%s1061] ss:$8 sm:$0x7]
    %s1063 = scalar_lea.vmem %s2, 24
    %v1064 = vld [vmem:[%s1063] ss:$8 sm:$0x7]
    %s1065 = scalar_lea.vmem %s2, 25
    %v1066 = vld [vmem:[%s1065] ss:$8 sm:$0x7]
    %1070 = vrot.lane.b32.xlu0 %v1056, 96
    %v1071 = vpop.permute.xlu0 %1070
    %1072 = vrot.lane.b32.xlu0 %v1057, 96
    %v1073 = vpop.permute.xlu0 %1072
    %1074 = vrot.lane.b32.xlu0 %v1058, 96
    %v1075 = vpop.permute.xlu0 %1074
    %v1076 = vsel %vm899, %v1071, %v1073
    %v1077 = vsel %vm899, %v1073, %v1075
    %v1081 = vsel %vm897, %v1075, 0.0
    %v1083 = vlaneseq
    %v1084 = vshrl.u32 %v1083, 7
    %v1085 = vsub.s32 0, %v1084
    %v1086 = vrot.slane %v1060, %v1085
    %v1087 = vlaneseq
    %v1088 = vshrl.u32 %v1087, 7
    %v1089 = vsub.s32 1, %v1088
    %v1090 = vrot.slane %v1060, %v1089
    %v1091 = vlaneseq
    %v1092 = vshrl.u32 %v1091, 7
    %v1093 = vsub.s32 2, %v1092
    %v1094 = vrot.slane %v1060, %v1093
    %v1098 = vsub.f32 %v900, %v1086
    %v1099 = vsub.f32 %v900, %v1090
    %v1100 = vsub.f32 %v898, %v1094
    %v1102 = vlaneseq
    %v1103 = vshrl.u32 %v1102, 7
    %v1104 = vsub.s32 0, %v1103
    %v1105 = vrot.slane %v1064, %v1104
    %v1106 = vlaneseq
    %v1107 = vshrl.u32 %v1106, 7
    %v1108 = vsub.s32 1, %v1107
    %v1109 = vrot.slane %v1064, %v1108
    %v1110 = vlaneseq
    %v1111 = vshrl.u32 %v1110, 7
    %v1112 = vsub.s32 2, %v1111
    %v1113 = vrot.slane %v1064, %v1112
    %v1117 = vmul.f32 %v1098, %v1105
    %v1118 = vmul.f32 %v1099, %v1109
    %v1119 = vmul.f32 %v1100, %v1113
    %v1120 = vmul.f32 %v1117, %v1056
    %v1121 = vmul.f32 %v1118, %v1057
    %v1122 = vmul.f32 %v1119, %v1058
    %v1124 = vlaneseq
    %v1125 = vshrl.u32 %v1124, 7
    %v1126 = vsub.s32 0, %v1125
    %v1127 = vrot.slane %v1062, %v1126
    %v1128 = vlaneseq
    %v1129 = vshrl.u32 %v1128, 7
    %v1130 = vsub.s32 1, %v1129
    %v1131 = vrot.slane %v1062, %v1130
    %v1132 = vlaneseq
    %v1133 = vshrl.u32 %v1132, 7
    %v1134 = vsub.s32 2, %v1133
    %v1135 = vrot.slane %v1062, %v1134
    %v1139 = vsub.f32 %v1127, %v900
    %v1140 = vsub.f32 %v1131, %v900
    %v1141 = vsub.f32 %v1135, %v898
    %v1143 = vlaneseq
    %v1144 = vshrl.u32 %v1143, 7
    %v1145 = vsub.s32 0, %v1144
    %v1146 = vrot.slane %v1066, %v1145
    %v1147 = vlaneseq
    %v1148 = vshrl.u32 %v1147, 7
    %v1149 = vsub.s32 1, %v1148
    %v1150 = vrot.slane %v1066, %v1149
    %v1151 = vlaneseq
    %v1152 = vshrl.u32 %v1151, 7
    %v1153 = vsub.s32 2, %v1152
    %v1154 = vrot.slane %v1066, %v1153
    %v1158 = vmul.f32 %v1139, %v1146
    %v1159 = vmul.f32 %v1140, %v1150
    %v1160 = vmul.f32 %v1141, %v1154
    %v1161 = vmul.f32 %v1158, %v1076
    %v1162 = vmul.f32 %v1159, %v1077
    %v1163 = vmul.f32 %v1160, %v1081
    %v1164 = vadd.f32 %v1120, %v1161
    %v1165 = vadd.f32 %v1121, %v1162
    %v1166 = vadd.f32 %v1122, %v1163
    %s1167 = scalar_lea.vmem %s2, 26
    %v1168 = vld [vmem:[%s1167] ss:$8 sm:$0x7]
    %s1169 = scalar_lea.vmem %s2, 27
    %v1170 = vld [vmem:[%s1169] ss:$8 sm:$0x7]
    %s1171 = scalar_lea.vmem %s2, 28
    %v1172 = vld [vmem:[%s1171] ss:$8 sm:$0x7]
    %s1173 = scalar_lea.vmem %s2, 29
    %v1174 = vld [vmem:[%s1173] ss:$8 sm:$0x7]
    %1178 = vrot.lane.b32.xlu0 %v1164, 96
    %v1179 = vpop.permute.xlu0 %1178
    %1180 = vrot.lane.b32.xlu0 %v1165, 96
    %v1181 = vpop.permute.xlu0 %1180
    %1182 = vrot.lane.b32.xlu0 %v1166, 96
    %v1183 = vpop.permute.xlu0 %1182
    %v1184 = vsel %vm899, %v1179, %v1181
    %v1185 = vsel %vm899, %v1181, %v1183
    %v1189 = vlaneseq
    %v1190 = vshrl.u32 %v1189, 7
    %v1191 = vsub.s32 0, %v1190
    %v1192 = vrot.slane %v1168, %v1191
    %v1193 = vlaneseq
    %v1194 = vshrl.u32 %v1193, 7
    %v1195 = vsub.s32 1, %v1194
    %v1196 = vrot.slane %v1168, %v1195
    %v1199 = vsub.f32 %v900, %v1192
    %v1200 = vsub.f32 %v900, %v1196
    %v1202 = vlaneseq
    %v1203 = vshrl.u32 %v1202, 7
    %v1204 = vsub.s32 0, %v1203
    %v1205 = vrot.slane %v1172, %v1204
    %v1206 = vlaneseq
    %v1207 = vshrl.u32 %v1206, 7
    %v1208 = vsub.s32 1, %v1207
    %v1209 = vrot.slane %v1172, %v1208
    %v1212 = vmul.f32 %v1199, %v1205
    %v1213 = vmul.f32 %v1200, %v1209
    %v1214 = vmul.f32 %v1212, %v1164
    %v1215 = vmul.f32 %v1213, %v1165
    %v1217 = vlaneseq
    %v1218 = vshrl.u32 %v1217, 7
    %v1219 = vsub.s32 0, %v1218
    %v1220 = vrot.slane %v1170, %v1219
    %v1221 = vlaneseq
    %v1222 = vshrl.u32 %v1221, 7
    %v1223 = vsub.s32 1, %v1222
    %v1224 = vrot.slane %v1170, %v1223
    %v1227 = vsub.f32 %v1220, %v900
    %v1228 = vsub.f32 %v1224, %v900
    %v1230 = vlaneseq
    %v1231 = vshrl.u32 %v1230, 7
    %v1232 = vsub.s32 0, %v1231
    %v1233 = vrot.slane %v1174, %v1232
    %v1234 = vlaneseq
    %v1235 = vshrl.u32 %v1234, 7
    %v1236 = vsub.s32 1, %v1235
    %v1237 = vrot.slane %v1174, %v1236
    %v1240 = vmul.f32 %v1227, %v1233
    %v1241 = vmul.f32 %v1228, %v1237
    %v1242 = vmul.f32 %v1240, %v1184
    %v1243 = vmul.f32 %v1241, %v1185
    %v1244 = vadd.f32 %v1214, %v1242
    %v1245 = vadd.f32 %v1215, %v1243
    %v1246 = vld [vmem:[%s3 + $0x20] sm:$0xff]
    %v1247 = vld [vmem:[%s3 + $0x28] sm:$0xff]
    %v1248 = vld [vmem:[%s3 + $0x30] sm:$0xff]
    %v1249 = vld [vmem:[%s3 + $0x38] sm:$0xff]
    %v1250 = vld [vmem:[%s3 + $0x40] sm:$0xff]
    %v1251 = vld [vmem:[%s3 + $0x48] sm:$0xff]
    %v1252 = vld [vmem:[%s3 + $0x50] sm:$0xff]
    %v1253 = vld [vmem:[%s3 + $0x58] sm:$0xff]
    %v1254 = vld [vmem:[%s3 + $0x60] sm:$0xff]
    %v1255 = vld [vmem:[%s3 + $0x68] sm:$0xff]
    %v1256 = vld [vmem:[%s3 + $0x70] sm:$0xff]
    %v1257 = vld [vmem:[%s3 + $0x78] sm:$0xff]
    %v1258 = vld [vmem:[%s3 + $0x80] sm:$0xff]
    %v1259 = vld [vmem:[%s3 + $0x88] sm:$0xff]
    %v1260 = vld [vmem:[%s3 + $0x90] sm:$0xff]
    %v1261 = vld [vmem:[%s3 + $0x98] sm:$0xff]
    %v1262 = vld [vmem:[%s3 + $0xa0] sm:$0xff]
    %v1263 = vld [vmem:[%s3 + $0xa8] sm:$0xff]
    %v1264 = vld [vmem:[%s3 + $0xb0] sm:$0xff]
    %v1265 = vld [vmem:[%s3 + $0xb8] sm:$0xff]
    %v1266 = vld [vmem:[%s3 + $0xc0] sm:$0xff]
    %v1267 = vld [vmem:[%s3 + $0xc8] sm:$0xff]
    %v1268 = vld [vmem:[%s3 + $0xd0] sm:$0xff]
    %v1269 = vld [vmem:[%s3 + $0xd8] sm:$0xff]
    %v1270 = vld [vmem:[%s3 + $0xe0] sm:$0xff]
    %v1271 = vld [vmem:[%s3 + $0xe8] sm:$0xff]
    %v1272 = vld [vmem:[%s3 + $0xf0] sm:$0xff]
    %v1273 = vld [vmem:[%s3 + $0xf8] sm:$0xff]
    %v1274 = vld [vmem:[%s3 + $0x100] sm:$0xff]
    %v1275 = vld [vmem:[%s3 + $0x108] sm:$0xff]
    %v1276 = vld [vmem:[%s3 + $0x110] sm:$0xff]
    %v1277 = vld [vmem:[%s3 + $0x118] sm:$0xff]
    %v1278 = vld [vmem:[%s3 + $0x120] sm:$0x1]
    %1279 = vmatprep.subr.mxu0 0.0
    %1280 = vmatpush1.msra.mxu0 %v1246
    %1281 = vmatprep.subr.mxu0 0.0
    %1282 = vmatpush1.msra.mxu0 %v1247
    %1283 = vmatprep.subr.mxu0 0.0
    %1284 = vmatpush1.msra.mxu0 %v1248
    %1285 = vmatprep.subr.mxu0 0.0
    %1286 = vmatpush1.msra.mxu0 %v1249
    %1287 = vmatprep.subr.mxu0 0.0
    %1288 = vmatpush1.msra.mxu0 %v1250
    %1289 = vmatprep.subr.mxu0 0.0
    %1290 = vmatpush1.msra.mxu0 %v1251
    %1291 = vmatprep.subr.mxu0 0.0
    %1292 = vmatpush1.msra.mxu0 %v1252
    %1293 = vmatprep.subr.mxu0 0.0
    %1294 = vmatpush1.msra.mxu0 %v1253
    %1295 = vmatprep.subr.mxu0 0.0
    %1296 = vmatpush1.msra.mxu0 %v1254
    %1297 = vmatprep.subr.mxu0 0.0
    %1298 = vmatpush1.msra.mxu0 %v1255
    %1299 = vmatprep.subr.mxu0 0.0
    %1300 = vmatpush1.msra.mxu0 %v1256
    %1301 = vmatprep.subr.mxu0 0.0
    %1302 = vmatpush1.msra.mxu0 %v1257
    %1303 = vmatprep.subr.mxu0 0.0
    %1304 = vmatpush1.msra.mxu0 %v1258
    %1305 = vmatprep.subr.mxu0 0.0
    %1306 = vmatpush1.msra.mxu0 %v1259
    %1307 = vmatprep.subr.mxu0 0.0
    %1308 = vmatpush1.msra.mxu0 %v1260
    %1309 = vmatprep.subr.mxu0 0.0
    %1310 = vmatpush1.msra.mxu0 %v1261
    %1311 = vmatprep.subr.mxu0 0.0
    %1312 = vmatpush1.msra.mxu0 %v1262
    %1313 = vmatprep.subr.mxu0 0.0
    %1314 = vmatpush1.msra.mxu0 %v1263
    %1315 = vmatprep.subr.mxu0 0.0
    %1316 = vmatpush1.msra.mxu0 %v1264
    %1317 = vmatprep.subr.mxu0 0.0
    %1318 = vmatpush1.msra.mxu0 %v1265
    %1319 = vmatprep.subr.mxu0 0.0
    %1320 = vmatpush1.msra.mxu0 %v1266
    %1321 = vmatprep.subr.mxu0 0.0
    %1322 = vmatpush1.msra.mxu0 %v1267
    %1323 = vmatprep.subr.mxu0 0.0
    %1324 = vmatpush1.msra.mxu0 %v1268
    %1325 = vmatprep.subr.mxu0 0.0
    %1326 = vmatpush1.msra.mxu0 %v1269
    %1327 = vmatprep.subr.mxu0 0.0
    %1328 = vmatpush1.msra.mxu0 %v1270
    %1329 = vmatprep.subr.mxu0 0.0
    %1330 = vmatpush1.msra.mxu0 %v1271
    %1331 = vmatprep.subr.mxu0 0.0
    %1332 = vmatpush1.msra.mxu0 %v1272
    %1333 = vmatprep.subr.mxu0 0.0
    %1334 = vmatpush1.msra.mxu0 %v1273
    %1335 = vmatprep.subr.mxu0 0.0
    %1336 = vmatpush1.msra.mxu0 %v1274
    %1337 = vmatprep.subr.mxu0 0.0
    %1338 = vmatpush1.msra.mxu0 %v1275
    %1339 = vmatprep.subr.mxu0 0.0
    %1340 = vmatpush1.msra.mxu0 %v1276
    %1341 = vmatprep.subr.mxu0 0.0
    %1342 = vmatpush1.msra.mxu0 %v1277
    %1343 = vmatprep.mubr.f32.mxu0 %v1245
    %1344 = vmatmul.mubr.f32.gmra.mrb[0].mxu0 %v1244
    %v1345 = vpop.f32.mrb[0].mxu0
    %v1346 = vadd.f32 0.0, %v1345
    %v1347 = vpop.f32.mrb[0].mxu0
    %1348 = vdwg.mxu0
    %v1350 = vsel %vm733, %v885, 0
    %1352 = vmatprep.subr.mxu0 0.0
    %1353 = vmatpush1.msra.mxu0 %v875
    %1354 = vmatprep.subr.mxu0 0.0
    %1355 = vmatpush1.msra.mxu0 %v876
    %1356 = vmatprep.subr.mxu0 0.0
    %1357 = vmatpush1.msra.mxu0 %v877
    %1358 = vmatprep.subr.mxu0 0.0
    %1359 = vmatpush1.msra.mxu0 %v878
    %1360 = vmatprep.subr.mxu0 0.0
    %1361 = vmatpush1.msra.mxu0 0.0
    %1362 = vmatprep.subr.mxu0 0.0
    %1363 = vmatpush1.msra.mxu0 0.0
    %1364 = vmatprep.subr.mxu0 0.0
    %1365 = vmatpush1.msra.mxu0 0.0
    %1366 = vmatprep.subr.mxu0 0.0
    %1367 = vmatpush1.msra.mxu0 0.0
    %1368 = vmatprep.subr.mxu0 0.0
    %1369 = vmatpush1.msra.mxu0 0.0
    %1370 = vmatprep.subr.mxu0 0.0
    %1371 = vmatpush1.msra.mxu0 0.0
    %1372 = vmatprep.subr.mxu0 0.0
    %1373 = vmatpush1.msra.mxu0 0.0
    %1374 = vmatprep.subr.mxu0 0.0
    %1375 = vmatpush1.msra.mxu0 0.0
    %1376 = vmatprep.subr.mxu0 0.0
    %1377 = vmatpush1.msra.mxu0 0.0
    %1378 = vmatprep.subr.mxu0 0.0
    %1379 = vmatpush1.msra.mxu0 0.0
    %1380 = vmatprep.subr.mxu0 0.0
    %1381 = vmatpush1.msra.mxu0 0.0
    %1382 = vmatprep.subr.mxu0 0.0
    %1383 = vmatpush1.msra.mxu0 0.0
    %1384 = vmatprep.subr.mxu0 0.0
    %1385 = vmatpush1.msra.mxu0 0.0
    %1386 = vmatprep.subr.mxu0 0.0
    %1387 = vmatpush1.msra.mxu0 0.0
    %1388 = vmatprep.subr.mxu0 0.0
    %1389 = vmatpush1.msra.mxu0 0.0
    %1390 = vmatprep.subr.mxu0 0.0
    %1391 = vmatpush1.msra.mxu0 0.0
    %1392 = vmatprep.subr.mxu0 0.0
    %1393 = vmatpush1.msra.mxu0 0.0
    %1394 = vmatprep.subr.mxu0 0.0
    %1395 = vmatpush1.msra.mxu0 0.0
    %1396 = vmatprep.subr.mxu0 0.0
    %1397 = vmatpush1.msra.mxu0 0.0
    %1398 = vmatprep.subr.mxu0 0.0
    %1399 = vmatpush1.msra.mxu0 0.0
    %1400 = vmatprep.subr.mxu0 0.0
    %1401 = vmatpush1.msra.mxu0 0.0
    %1402 = vmatprep.subr.mxu0 0.0
    %1403 = vmatpush1.msra.mxu0 0.0
    %1404 = vmatprep.subr.mxu0 0.0
    %1405 = vmatpush1.msra.mxu0 0.0
    %1406 = vmatprep.subr.mxu0 0.0
    %1407 = vmatpush1.msra.mxu0 0.0
    %1408 = vmatprep.subr.mxu0 0.0
    %1409 = vmatpush1.msra.mxu0 0.0
    %1410 = vmatprep.subr.mxu0 0.0
    %1411 = vmatpush1.msra.mxu0 0.0
    %1412 = vmatprep.subr.mxu0 0.0
    %1413 = vmatpush1.msra.mxu0 0.0
    %1414 = vmatprep.subr.mxu0 0.0
    %1415 = vmatpush1.msra.mxu0 0.0
    %1416 = vmatprep.mubr.f32.mxu0 0.0
    %1417 = vmatmul.mubr.f32.gmra.mrb[0].mxu0 %v1350
    %v1418 = vpop.f32.mrb[0].mxu0
    %v1419 = vadd.f32 %v1346, %v1418
    %v1420 = vpop.f32.mrb[0].mxu0
    %1421 = vdwg.mxu0
    %v1422 = vlaneseq
    %v1423 = vshrl.u32 %v1422, 7
    %v1424 = vsub.s32 0, %v1423
    %v1425 = vrot.slane %v1278, %v1424
    %v1426 = vadd.f32 %v1419, %v1425
    %1427 = vst [vmem:[#allocation2] sm:$0x3] %v1426
    // Predicated region
    $region18: #{ekan_forward.1} parent=1 // pred_check
      _
    $region19: #{ekan_forward.1} parent=1 // pred_check_branch
      %1429 = sbr.rel (0) target = $region21
    $region20: #{ekan_forward.1} parent=1 // pred_region
      %s1431 = ssub.s32 32, 32
      %1432 = vsyncadd [#allocation3], %s1431
      %s1434 = sshll.u32 [#allocation2], 4
      %s1435 = int_to_ptr.vmem [resolvable:$true] %s1434
      %1437 = dma.vmem_to_hbm [thread:$0]  %s1435, 32, %s4, [#allocation3]
    $region21: #{ekan_forward.1} parent=1 // pred_fallthru
      _
    // Predicated region
    $region22: #{ekan_forward.1} parent=1 // pred_check
      _
    $region23: #{ekan_forward.1} parent=1 // pred_check_branch
      %1439 = sbr.rel (0) target = $region25
    $region24: #{ekan_forward.1} parent=1 // pred_region
      %1440 = dma.done [#allocation3], 32
    $region25: #{ekan_forward.1} parent=1 // pred_fallthru
      _
    %1441 = vsyncpa [#allocation3], 1

</llo_original>
